<compile_context>
chip_gen: v5e
topology: v5e:2x2
jax: 0.10.0
libtpu: 0.0.40
codegen_flags: <defaults>
</compile_context>

<pallas_src>
import functools

import jax
import jax.numpy as jnp
from jax.experimental import pallas as pl
from jax.experimental.pallas import tpu as pltpu


def _round_up(v, m):
    return (v + m - 1) // m * m


def _largest_divisor_tile(n, cap, quantum):
    """Largest t <= cap with t % quantum == 0 and n % t == 0 (None if none)."""
    t = (min(cap, n) // quantum) * quantum
    while t >= quantum:
        if n % t == 0:
            return t
        t -= quantum
    return None


# ----------------------------------------------------------------------------
# Kernel 1: tiled matmul + folded-BN bias + SiLU   (used for the 1x1 conv)
# ----------------------------------------------------------------------------
def _matmul_bias_silu_kernel(x_ref, w_ref, b_ref, o_ref, acc_ref):
    @pl.when(pl.program_id(2) == 0)
    def _():
        acc_ref[...] = jnp.zeros_like(acc_ref)

    acc_ref[...] += jnp.dot(x_ref[...], w_ref[...],
                            preferred_element_type=jnp.float32)

    @pl.when(pl.program_id(2) == pl.num_programs(2) - 1)
    def _():
        y = acc_ref[...] + b_ref[...]          # folded BatchNorm bias (f32)
        o_ref[...] = (y * jax.nn.sigmoid(y)).astype(o_ref.dtype)   # SiLU


def matmul_bias_silu_pallas(x2d, w2d, bias, *, out_dtype=jnp.bfloat16):
    """x2d (M,K), w2d (K,N) with BN scale folded, bias (N,).
    Returns (M, Np) with Np = round_up(N,128); padded channels are exactly 0
    (bias padding is kept at 0, so SiLU(0) = 0)."""
    M, K = x2d.shape
    K2, N = w2d.shape
    assert K == K2
    Kp = _round_up(K, 128)
    Np = _round_up(N, 128)

    tm = _largest_divisor_tile(M, 512, 8)
    if tm is None:                      # M not a multiple of 8 -> pad rows.
        tm = min(512, _round_up(M, 8))
    Mp = _round_up(M, tm)
    tk = _largest_divisor_tile(Kp, 1024, 128)   # tk == Kp whenever Kp <= 1024
    tn = _largest_divisor_tile(Np, 512, 128)

    xp = x2d.astype(jnp.bfloat16)
    if (Mp, Kp) != (M, K):
        xp = jnp.pad(xp, ((0, Mp - M), (0, Kp - K)))
    wp = w2d.astype(jnp.bfloat16)
    if (Kp, Np) != (K, N):
        wp = jnp.pad(wp, ((0, Kp - K), (0, Np - N)))
    # Padded bias entries MUST stay 0 so padded output channels are exactly 0.
    bp = jnp.pad(bias.astype(jnp.float32).reshape(1, -1), ((0, 0), (0, Np - N)))

    out = pl.pallas_call(
        _matmul_bias_silu_kernel,
        out_shape=jax.ShapeDtypeStruct((Mp, Np), out_dtype),
        grid_spec=pltpu.PrefetchScalarGridSpec(
            num_scalar_prefetch=0,
            grid=(Mp // tm, Np // tn, Kp // tk),
            in_specs=[
                pl.BlockSpec((tm, tk), lambda i, j, k: (i, k)),
                pl.BlockSpec((tk, tn), lambda i, j, k: (k, j)),
                pl.BlockSpec((1, tn), lambda i, j, k: (0, j)),
            ],
            out_specs=pl.BlockSpec((tm, tn), lambda i, j, k: (i, j)),
            scratch_shapes=[pltpu.VMEM((tm, tn), jnp.float32)],
        ),
        compiler_params=pltpu.CompilerParams(
            dimension_semantics=("parallel", "parallel", "arbitrary"),
            vmem_limit_bytes=48 * 1024 * 1024),
    )(xp, wp, bp)
    return out[:M] if Mp != M else out


def matmul_bias_silu_ref(x2d, w2d, bias, *, out_dtype=jnp.bfloat16):
    """Plain-JAX reference mirroring the kernel's bf16/f32 dtype handling."""
    N = w2d.shape[1]
    Np = _round_up(N, 128)
    y = jnp.dot(x2d.astype(jnp.bfloat16).astype(jnp.float32),
                w2d.astype(jnp.bfloat16).astype(jnp.float32))
    y = y + bias.astype(jnp.float32).reshape(1, -1)
    y = (y * jax.nn.sigmoid(y)).astype(out_dtype)
    return jnp.pad(y, ((0, 0), (0, Np - N)))


# ----------------------------------------------------------------------------
# Kernel 2: direct 3x3 conv (stride 1, pad 1) + folded-BN bias + SiLU.
#           No im2col buffer; the halo'd activation is DMA'd per row-tile.
# ----------------------------------------------------------------------------
def _conv3x3_bias_silu_kernel(x_hbm, w_ref, b_ref, o_ref,
                              xbuf, xtap, acc_ref, sem, *, th, W):
    bi = pl.program_id(0)
    ti = pl.program_id(1)

    # Load the (th+2, W+2, Cp) halo'd slab once per (batch, row-tile); reuse it
    # across the output-channel axis (innermost grid axis).  The three in-VMEM
    # shifted copies (one per horizontal tap) keep the matmul LHS slices below
    # free of sub-lane-offset loads.
    @pl.when(pl.program_id(2) == 0)
    def _():
        cp = pltpu.make_async_copy(
            x_hbm.at[bi, pl.ds(ti * th, th + 2)], xbuf, sem.at[0])
        cp.start()
        cp.wait()
        for kw in range(3):
            pltpu.sync_copy(xbuf.at[:, pl.ds(kw, W), :], xtap.at[kw])

    acc_ref[...] = jnp.zeros_like(acc_ref)
    Cp = xbuf.shape[-1]
    for kh in range(3):
        for kw in range(3):
            lhs = xtap[kw, pl.ds(kh, th), :, :].reshape(th * W, Cp)
            acc_ref[...] += jnp.dot(lhs, w_ref[kh * 3 + kw],
                                    preferred_element_type=jnp.float32)

    y = acc_ref[...] + b_ref[...]              # folded BatchNorm bias (f32)
    y = y * jax.nn.sigmoid(y)                  # SiLU
    o_ref[...] = y.reshape(o_ref.shape).astype(o_ref.dtype)


def conv3x3_bias_silu_pallas(x_nhwc, w9, bias, *, out_dtype=jnp.bfloat16):
    """x_nhwc: (B, H, W, Cp) bf16 with Cp % 128 == 0 (padded channels are 0).
    w9: (9, Cp, cout) BN-folded weights (tap order kh*3+kw).  bias: (cout,).
    Returns (B, H*W, Np) bf16 with Np = round_up(cout, 128); padded chans 0."""
    B, H, W, Cp = x_nhwc.shape
    assert Cp % 128 == 0
    cout = w9.shape[-1]
    Np = _round_up(cout, 128)

    th = _largest_divisor_tile(H, max(1, 1024 // max(W, 1)), 1) or 1
    n_ht = H // th
    tn = _largest_divisor_tile(Np, 256, 128)

    # Single spatial zero-pad (replaces the old 9x-wide im2col materialization).
    xp = jnp.pad(x_nhwc, ((0, 0), (1, 1), (1, 1), (0, 0)))
    wp = w9.astype(jnp.bfloat16)
    if Np != cout:
        wp = jnp.pad(wp, ((0, 0), (0, 0), (0, Np - cout)))
    bp = jnp.pad(bias.astype(jnp.float32).reshape(1, -1),
                 ((0, 0), (0, Np - cout)))      # pad MUST stay 0

    kernel = functools.partial(_conv3x3_bias_silu_kernel, th=th, W=W)
    out = pl.pallas_call(
        kernel,
        out_shape=jax.ShapeDtypeStruct((B, n_ht, th * W, Np), out_dtype),
        grid_spec=pltpu.PrefetchScalarGridSpec(
            num_scalar_prefetch=0,
            grid=(B, n_ht, Np // tn),
            in_specs=[
                pl.BlockSpec(memory_space=pl.ANY),          # halo'd activation
                pl.BlockSpec((9, Cp, tn), lambda b, t, j: (0, 0, j)),
                pl.BlockSpec((1, tn), lambda b, t, j: (0, j)),
            ],
            out_specs=pl.BlockSpec((1, 1, th * W, tn),
                                   lambda b, t, j: (b, t, 0, j)),
            scratch_shapes=[
                pltpu.VMEM((th + 2, W + 2, Cp), jnp.bfloat16),   # halo slab
                pltpu.VMEM((3, th + 2, W, Cp), jnp.bfloat16),    # 3 kw shifts
                pltpu.VMEM((th * W, tn), jnp.float32),           # accumulator
                pltpu.SemaphoreType.DMA((1,)),
            ],
        ),
        compiler_params=pltpu.CompilerParams(
            dimension_semantics=("parallel", "parallel", "arbitrary"),
            vmem_limit_bytes=48 * 1024 * 1024),
    )(xp, wp, bp)
    return out.reshape(B, H * W, Np)


def conv3x3_bias_silu_ref(x_nhwc, w9, bias, *, out_dtype=jnp.bfloat16):
    """Plain-JAX reference (shift-and-matmul) mirroring bf16/f32 handling."""
    B, H, W, Cp = x_nhwc.shape
    cout = w9.shape[-1]
    Np = _round_up(cout, 128)
    xp = jnp.pad(x_nhwc.astype(jnp.bfloat16), ((0, 0), (1, 1), (1, 1), (0, 0)))
    wf = w9.astype(jnp.bfloat16).astype(jnp.float32)
    acc = jnp.zeros((B * H * W, cout), jnp.float32)
    for kh in range(3):
        for kw in range(3):
            lhs = xp[:, kh:kh + H, kw:kw + W, :].reshape(B * H * W, Cp)
            acc = acc + jnp.dot(lhs.astype(jnp.float32), wf[kh * 3 + kw])
    y = acc + bias.astype(jnp.float32).reshape(1, -1)
    y = (y * jax.nn.sigmoid(y)).astype(out_dtype)
    y = jnp.pad(y, ((0, 0), (0, Np - cout)))
    return y.reshape(B, H * W, Np)


# ----------------------------------------------------------------------------
# Kernels 3/4: SimAM — streaming per-channel stats, then energy + gating
#              (+ fused residual add), on lane-dense (1, t_hw, Cp) bf16 tiles.
# ----------------------------------------------------------------------------
def _simam_stats_kernel(x_ref, sum_ref, sq_ref):
    @pl.when(pl.program_id(1) == 0)
    def _():
        sum_ref[...] = jnp.zeros_like(sum_ref)
        sq_ref[...] = jnp.zeros_like(sq_ref)
    x = x_ref[...].astype(jnp.float32)                     # (1, t_hw, Cp)
    sum_ref[...] += jnp.sum(x, axis=1, keepdims=True)      # f32 accumulators
    sq_ref[...] += jnp.sum(x * x, axis=1, keepdims=True)


def _simam_apply_kernel(x_ref, mu_ref, inv_ref, o_ref):
    x = x_ref[...].astype(jnp.float32)
    y = jnp.square(x - mu_ref[...]) * inv_ref[...] + 0.5
    o_ref[...] = (x * jax.nn.sigmoid(y)).astype(o_ref.dtype)


def _simam_apply_res_kernel(x_ref, res_ref, mu_ref, inv_ref, o_ref):
    x = x_ref[...].astype(jnp.float32)
    y = jnp.square(x - mu_ref[...]) * inv_ref[...] + 0.5
    o_ref[...] = (res_ref[...].astype(jnp.float32)
                  + x * jax.nn.sigmoid(y)).astype(o_ref.dtype)


def simam_attention_pallas(h, residual=None, *, e_lambda=1e-4,
                           out_dtype=jnp.bfloat16):
    """h: (B, HW, Cp) bf16, Cp % 128 == 0 (padded channels must be 0).
    residual: optional (B, HW, Cp) bf16, fused into the output (bf16)."""
    B, HW, Cp = h.shape
    assert Cp % 128 == 0
    # ~1 MiB bf16 input tile, preferring an exact divisor of HW (no padding).
    cap = max(8, (1 << 20) // (Cp * 2))
    t_hw = _largest_divisor_tile(HW, cap, 8)
    if t_hw is None:
        t_hw = min(_round_up(HW, 8), _round_up(cap, 8))
    HWp = _round_up(HW, t_hw)
    n_t = HWp // t_hw
    hp = h if HWp == HW else jnp.pad(h, ((0, 0), (0, HWp - HW), (0, 0)))

    # ---- pass 1: per-channel sum / sum-of-squares (streamed over HW) --------
    s, ss = pl.pallas_call(
        _simam_stats_kernel,
        out_shape=(jax.ShapeDtypeStruct((B, 1, Cp), jnp.float32),
                   jax.ShapeDtypeStruct((B, 1, Cp), jnp.float32)),
        grid_spec=pltpu.PrefetchScalarGridSpec(
            num_scalar_prefetch=0,
            grid=(B, n_t),
            in_specs=[pl.BlockSpec((1, t_hw, Cp), lambda b, t: (b, t, 0))],
            out_specs=[pl.BlockSpec((1, 1, Cp), lambda b, t: (b, 0, 0)),
                       pl.BlockSpec((1, 1, Cp), lambda b, t: (b, 0, 0))],
        ),
        compiler_params=pltpu.CompilerParams(
            dimension_semantics=("parallel", "arbitrary"),
            vmem_limit_bytes=32 * 1024 * 1024),
    )(hp)

    # Tiny (B, 1, Cp) scalars: finish the statistics in plain XLA (f32).
    n = float(HW)
    mu = s / n
    d_sum = jnp.maximum(ss - s * mu, 0.0)                  # sum((x - mu)^2)
    inv_denom = 1.0 / (4.0 * (d_sum / (n - 1.0) + e_lambda))

    # ---- pass 2: energy + sigmoid gating (+ fused residual add) -------------
    if residual is not None:
        rp = residual if HWp == HW else jnp.pad(
            residual, ((0, 0), (0, HWp - HW), (0, 0)))
        kernel = _simam_apply_res_kernel
        ins = (hp, rp, mu, inv_denom)
        in_specs = [pl.BlockSpec((1, t_hw, Cp), lambda b, t: (b, t, 0)),
                    pl.BlockSpec((1, t_hw, Cp), lambda b, t: (b, t, 0)),
                    pl.BlockSpec((1, 1, Cp), lambda b, t: (b, 0, 0)),
                    pl.BlockSpec((1, 1, Cp), lambda b, t: (b, 0, 0))]
    else:
        kernel = _simam_apply_kernel
        ins = (hp, mu, inv_denom)
        in_specs = [pl.BlockSpec((1, t_hw, Cp), lambda b, t: (b, t, 0)),
                    pl.BlockSpec((1, 1, Cp), lambda b, t: (b, 0, 0)),
                    pl.BlockSpec((1, 1, Cp), lambda b, t: (b, 0, 0))]

    out = pl.pallas_call(
        kernel,
        out_shape=jax.ShapeDtypeStruct((B, HWp, Cp), out_dtype),
        grid_spec=pltpu.PrefetchScalarGridSpec(
            num_scalar_prefetch=0,
            grid=(B, n_t),
            in_specs=in_specs,
            out_specs=pl.BlockSpec((1, t_hw, Cp), lambda b, t: (b, t, 0)),
        ),
        compiler_params=pltpu.CompilerParams(
            dimension_semantics=("parallel", "parallel"),
            vmem_limit_bytes=32 * 1024 * 1024),
    )(*ins)
    return out[:, :HW, :] if HWp != HW else out


def simam_attention_ref(h, residual=None, *, e_lambda=1e-4,
                        out_dtype=jnp.bfloat16):
    """PyTorch-formula reference (mean, then squared deviations) in f32."""
    x = h.astype(jnp.float32)
    n = x.shape[1] - 1
    mu = jnp.mean(x, axis=1, keepdims=True)
    d = jnp.square(x - mu)
    y = d / (4.0 * (jnp.sum(d, axis=1, keepdims=True) / n + e_lambda)) + 0.5
    out = x * jax.nn.sigmoid(y)
    if residual is not None:
        out = out + residual.astype(jnp.float32)
    return out.astype(out_dtype)


# ----------------------------------------------------------------------------
# Params and SimAM_Bottleneck forward
# ----------------------------------------------------------------------------
def init_conv(key, cin, cout, k):
    kw, kg, kb, km, kv = jax.random.split(key, 5)
    w = 0.1 * jax.random.normal(kw, (k, k, cin, cout), jnp.float32)   # HWIO
    gamma = 1.0 + 0.1 * jax.random.normal(kg, (cout,), jnp.float32)
    beta = 0.1 * jax.random.normal(kb, (cout,), jnp.float32)
    running_mean = 0.1 * jax.random.normal(km, (cout,), jnp.float32)
    running_var = 1.0 + 0.1 * jax.random.uniform(kv, (cout,), jnp.float32)
    eps = 1e-5                                    # nn.BatchNorm2d default
    scale = gamma / jnp.sqrt(running_var + eps)   # eval-mode BN folded
    bias = beta - running_mean * scale
    return (w, scale, bias)


def init_simam_bottleneck(key, c1, c2, shortcut=True, g=1, e=0.5):
    assert g == 1  # TODO(synk): grouped conv (g > 1) not implemented.
    c_ = int(c2 * e)
    k1, k2 = jax.random.split(key)
    return {
        "cv1": init_conv(k1, c1, c_, 1),
        "cv2": init_conv(k2, c_, c2, 3),
        "add": bool(shortcut and c1 == c2),   # matches PyTorch: shortcut and c1==c2
        "e_lambda": 1e-4,
    }


def simam_bottleneck_forward(params, x_nchw, use_pallas=True):
    matmul_fn = matmul_bias_silu_pallas if use_pallas else matmul_bias_silu_ref
    conv3_fn = conv3x3_bias_silu_pallas if use_pallas else conv3x3_bias_silu_ref
    simam_fn = simam_attention_pallas if use_pallas else simam_attention_ref

    x = jnp.transpose(x_nchw, (0, 2, 3, 1)).astype(jnp.float32)   # NCHW -> NHWC
    B, H, W, c1 = x.shape
    w1, s1, b1 = params["cv1"]          # (1,1,c1,c_)
    w2, s2, b2 = params["cv2"]          # (3,3,c_,c2)
    c_ = w1.shape[-1]
    c2 = w2.shape[-1]

    # cv1: 1x1 conv + BN + SiLU == matmul with folded BN scale.
    x2d = x.reshape(B * H * W, c1)
    w1_2d = w1.reshape(c1, c_) * s1.reshape(1, -1)
    y1 = matmul_fn(x2d, w1_2d, b1)                       # (B*H*W, Cp1) bf16
    Cp1 = y1.shape[-1]

    # cv2: direct 3x3 conv + BN + SiLU (no im2col); padded input channels of
    # y1 are matched by zero-padded weight rows, so they contribute exactly 0.
    w2f = w2 * s2.reshape(1, 1, 1, -1)                   # fold BN scale
    w9 = jnp.pad(w2f, ((0, 0), (0, 0), (0, Cp1 - c_), (0, 0))).reshape(9, Cp1, c2)
    y2 = conv3_fn(y1.reshape(B, H, W, Cp1), w9, b2)      # (B, H*W, Cp2) bf16
    Cp2 = y2.shape[-1]

    # SimAM attention (+ fused shortcut add), streamed over HW.
    res = None
    if params["add"]:                   # c1 == c2 guaranteed when add is True
        res = x2d.astype(jnp.bfloat16).reshape(B, H * W, c1)
        if Cp2 != c1:
            res = jnp.pad(res, ((0, 0), (0, 0), (0, Cp2 - c1)))
    out = simam_fn(y2, res, e_lambda=params["e_lambda"])  # (B, HW, Cp2) bf16

    if Cp2 != c2:                       # no-op copy when c2 % 128 == 0
        out = out[:, :, :c2]
    out = out.reshape(B, H, W, c2)
    return jnp.transpose(out, (0, 3, 1, 2)).astype(jnp.float32)   # NCHW, f32


# ----------------------------------------------------------------------------
if __name__ == "__main__":
    key = jax.random.PRNGKey(0)
    kx, kp = jax.random.split(key)

    B, C, H, W = 2, 4, 16, 16
    x = jax.random.normal(kx, (B, C, H, W), jnp.float32)
    params = init_simam_bottleneck(kp, c1=C, c2=C, shortcut=True, e=0.5)

    out = jax.block_until_ready(simam_bottleneck_forward(params, x, use_pallas=True))
    assert out.shape == (B, C, H, W), out.shape

    ref = jax.block_until_ready(simam_bottleneck_forward(params, x, use_pallas=False))
    max_err = float(jnp.max(jnp.abs(out - ref)))
    # bf16 MXU path vs bf16-mirrored JAX reference: allow a couple of bf16 ulps.
    assert jnp.allclose(out, ref, atol=2e-2, rtol=2e-2), f"max abs diff {max_err}"

    print("KERNEL_OK")
</pallas_src>

<mosaic_0001>
module attributes {stable_mosaic.version = 11 : i64} {
  func.func @_matmul_bias_silu_kernel(%arg0: i32, %arg1: i32, %arg2: i32, %arg3: memref<512x128xbf16, #tpu.memory_space<vmem>>, %arg4: memref<128x128xbf16, #tpu.memory_space<vmem>>, %arg5: memref<1x128xf32, #tpu.memory_space<vmem>>, %arg6: memref<512x128xbf16, #tpu.memory_space<vmem>>, %arg7: memref<512x128xf32, #tpu.memory_space<vmem>>) attributes {dimension_semantics = [#tpu.dimension_semantics<parallel>, #tpu.dimension_semantics<parallel>, #tpu.dimension_semantics<arbitrary>], iteration_bounds = array<i64: 1, 1, 1>, scalar_prefetch = 0 : i64, scratch_operands = 1 : i64, tpu.core_type = #tpu.core_type<tc>, window_params = [{transform_indices = @transform_0, window_bounds = array<i64: 512, 128>}, {transform_indices = @transform_1, window_bounds = array<i64: 128, 128>}, {transform_indices = @transform_2, window_bounds = array<i64: 1, 128>}, {transform_indices = @transform_3, window_bounds = array<i64: 512, 128>}]} {
    %c0_i32 = arith.constant 0 : i32
    %0 = arith.cmpi eq, %arg2, %c0_i32 : i32
    %1 = arith.extui %0 : i1 to i32
    %c0_i32_0 = arith.constant 0 : i32
    %2 = arith.cmpi ne, %1, %c0_i32_0 : i32
    scf.if %2 {
      %cst_10 = arith.constant 0.000000e+00 : f32
      %12 = vector.broadcast %cst_10 : f32 to vector<512x128xf32>
      %c0_11 = arith.constant 0 : index
      %c0_12 = arith.constant 0 : index
      %13 = vector.load %arg7[%c0_11, %c0_12] : memref<512x128xf32, #tpu.memory_space<vmem>>, vector<512x128xf32>
      tpu.vector_store %arg7[%c0_11, %c0_12], %12 {strides = array<i32>} : memref<512x128xf32, #tpu.memory_space<vmem>>, vector<512x128xf32>,
    } else {
    }
    %c0 = arith.constant 0 : index
    %c0_1 = arith.constant 0 : index
    %3 = vector.load %arg7[%c0, %c0_1] : memref<512x128xf32, #tpu.memory_space<vmem>>, vector<512x128xf32>
    %c0_2 = arith.constant 0 : index
    %c0_3 = arith.constant 0 : index
    %4 = vector.load %arg3[%c0_2, %c0_3] : memref<512x128xbf16, #tpu.memory_space<vmem>>, vector<512x128xbf16>
    %c0_4 = arith.constant 0 : index
    %c0_5 = arith.constant 0 : index
    %5 = vector.load %arg4[%c0_4, %c0_5] : memref<128x128xbf16, #tpu.memory_space<vmem>>, vector<128x128xbf16>
    %cst = arith.constant dense<0.000000e+00> : vector<512x128xf32>
    %6 = tpu.matmul %4, %5, %cst {dimension_numbers = #tpu.dot_dimension_numbers<[1], [0], [0], [1], [0, 0, 1, 1], [], []>} : vector<512x128xbf16>, vector<128x128xbf16>, vector<512x128xf32> -> vector<512x128xf32>
    %7 = arith.addf %3, %6 : vector<512x128xf32>
    %c0_6 = arith.constant 0 : index
    %c0_7 = arith.constant 0 : index
    %8 = vector.load %arg7[%c0_6, %c0_7] : memref<512x128xf32, #tpu.memory_space<vmem>>, vector<512x128xf32>
    tpu.vector_store %arg7[%c0_6, %c0_7], %7 {strides = array<i32>} : memref<512x128xf32, #tpu.memory_space<vmem>>, vector<512x128xf32>,
    %c0_i32_8 = arith.constant 0 : i32
    %9 = arith.cmpi eq, %arg2, %c0_i32_8 : i32
    %10 = arith.extui %9 : i1 to i32
    %c0_i32_9 = arith.constant 0 : i32
    %11 = arith.cmpi ne, %10, %c0_i32_9 : i32
    scf.if %11 {
      %c0_10 = arith.constant 0 : index
      %c0_11 = arith.constant 0 : index
      %12 = vector.load %arg7[%c0_10, %c0_11] : memref<512x128xf32, #tpu.memory_space<vmem>>, vector<512x128xf32>
      %c0_12 = arith.constant 0 : index
      %c0_13 = arith.constant 0 : index
      %13 = vector.load %arg5[%c0_12, %c0_13] : memref<1x128xf32, #tpu.memory_space<vmem>>, vector<1x128xf32>
      %14 = vector.broadcast %13 : vector<1x128xf32> to vector<512x128xf32>
      %15 = arith.addf %12, %14 : vector<512x128xf32>
      %16 = arith.negf %15 : vector<512x128xf32>
      %17 = math.exp %16 : vector<512x128xf32>
      %cst_14 = arith.constant 1.000000e+00 : f32
      %18 = vector.broadcast %cst_14 : f32 to vector<512x128xf32>
      %19 = arith.addf %18, %17 : vector<512x128xf32>
      %20 = arith.divf %18, %19 : vector<512x128xf32>
      %21 = arith.mulf %15, %20 : vector<512x128xf32>
      %22 = arith.truncf %21 : vector<512x128xf32> to vector<512x128xbf16>
      %c0_15 = arith.constant 0 : index
      %c0_16 = arith.constant 0 : index
      %23 = vector.load %arg6[%c0_15, %c0_16] : memref<512x128xbf16, #tpu.memory_space<vmem>>, vector<512x128xbf16>
      tpu.vector_store %arg6[%c0_15, %c0_16], %22 {strides = array<i32>} : memref<512x128xbf16, #tpu.memory_space<vmem>>, vector<512x128xbf16>,
    } else {
    }
    return
  }
  func.func @transform_0(%arg0: i32, %arg1: i32, %arg2: i32) -> (i32, i32) {
    %c0_i32 = arith.constant 0 : i32
    return %arg0, %arg2 : i32, i32
  }
  func.func @transform_1(%arg0: i32, %arg1: i32, %arg2: i32) -> (i32, i32) {
    %c0_i32 = arith.constant 0 : i32
    return %arg2, %arg1 : i32, i32
  }
  func.func @transform_2(%arg0: i32, %arg1: i32, %arg2: i32) -> (i32, i32) {
    %c0_i32 = arith.constant 0 : i32
    %c0_i32_0 = arith.constant 0 : i32
    return %c0_i32, %arg1 : i32, i32
  }
  func.func @transform_3(%arg0: i32, %arg1: i32, %arg2: i32) -> (i32, i32) {
    %c0_i32 = arith.constant 0 : i32
    return %arg0, %arg1 : i32, i32
  }
}

</mosaic_0001>

<llo_original>
// kernel: tpu_custom_call.1
$region0: #{tpu_custom_call.1}
  #allocation0 [shape = 'u32[]', space=smem, size = 0x4, offset = 0x4, fixed_abs, tag = 'smem constant byte address 0x4 - core index']
  #allocation1 [shape = 'u32[72,128]{1,0:T(1,128)}', space=vmem, size = 0x9000, scoped, tag = 'internal scratch']
  #allocation2 [shape = 'f32[512,128]{1,0:T(8,128)}', space=vmem, size = 0x40000, scoped, tag = 'scratch operand']
  %s0 = inlined_call_operand.hbm [shape: bf16[512,128], index: 0, kind: input, shape index: {}]
  %s1 = inlined_call_operand.hbm [shape: bf16[128,128], index: 1, kind: input, shape index: {}]
  %s2 = inlined_call_operand.vmem [shape: f32[1,128], index: 2, kind: input, shape index: {}]
  %s3 = inlined_call_operand.hbm [shape: bf16[512,128], index: 3, kind: output, shape index: {}]
  %s4 = sld [smem:[#allocation0]]
  $region38: #{tpu_custom_call.1} parent=0
    _
  %s6 = ssub.s32 1, %s4
  %s7 = scalar_select 0, %s6, %s4
  $region1: #{tpu_custom_call.1} parent=0
    #allocation3 [shape = 'u8[131072]{0}', space=vmem, size = 0x20000, scoped, tag = 'input window, operand 0, single buffered']
    #allocation4 [shape = 's32[1]{0}', space=sflag, size = 0x4, scoped, tag = 'scoped memory for tpu_custom_call.1']
    #allocation5 [shape = 's32[1]{0}', space=sflag, size = 0x4, scoped, tag = 'scoped memory for tpu_custom_call.1']
    #allocation6 [shape = 'u8[32768]{0}', space=vmem, size = 0x8000, scoped, tag = 'input window, operand 1, single buffered']
    #allocation7 [shape = 's32[1]{0}', space=sflag, size = 0x4, scoped, tag = 'scoped memory for tpu_custom_call.1']
    #allocation8 [shape = 'u8[131072]{0}', space=vmem, size = 0x20000, scoped, tag = 'output window, operand 0, single buffered']
    %8 = vsyncpa [#allocation4], 0
    %9 = vsyncpa [#allocation7], 0
    %10 = vsyncpa [#allocation5], 0
    // Predicated region
    $region2: #{tpu_custom_call.1} parent=1 // pred_check
      _
    $region3: #{tpu_custom_call.1} parent=1 // pred_check_branch
      %12 = sbr.rel (0) target = $region5
    $region4: #{tpu_custom_call.1} parent=1 // pred_region
      %14 = vsyncadd [#allocation4], 0
      %s15 = sshll.u32 %s0, 4
      %s16 = int_to_ptr.hbm [resolvable:$true] %s15
      %s17 = sshll.u32 [#allocation3], 4
      %s18 = int_to_ptr.vmem [resolvable:$true] %s17
      %23 = dma.hbm_to_vmem [thread:$0]  %s16, 4096, %s18, [#allocation4], 64, 64, 4
    $region5: #{tpu_custom_call.1} parent=1 // pred_fallthru
      _
    // Predicated region
    $region6: #{tpu_custom_call.1} parent=1 // pred_check
      _
    $region7: #{tpu_custom_call.1} parent=1 // pred_check_branch
      %25 = sbr.rel (0) target = $region9
    $region8: #{tpu_custom_call.1} parent=1 // pred_region
      %27 = vsyncadd [#allocation7], 0
      %s28 = sshll.u32 %s1, 4
      %s29 = int_to_ptr.hbm [resolvable:$true] %s28
      %s30 = sshll.u32 [#allocation6], 4
      %s31 = int_to_ptr.vmem [resolvable:$true] %s30
      %36 = dma.hbm_to_vmem [thread:$0]  %s29, 1024, %s31, [#allocation7], 64, 64, 4
    $region9: #{tpu_custom_call.1} parent=1 // pred_fallthru
      _
    // Predicated region
    $region10: #{tpu_custom_call.1} parent=1 // pred_check
      _
    $region11: #{tpu_custom_call.1} parent=1 // pred_check_branch
      %38 = sbr.rel (0) target = $region13
    $region12: #{tpu_custom_call.1} parent=1 // pred_region
      _
    $region13: #{tpu_custom_call.1} parent=1 // pred_fallthru
      _
    // Predicated region
    $region14: #{tpu_custom_call.1} parent=1 // pred_check
      _
    $region15: #{tpu_custom_call.1} parent=1 // pred_check_branch
      %40 = sbr.rel (0) target = $region17
    $region16: #{tpu_custom_call.1} parent=1 // pred_region
      %42 = dma.done [#allocation4], 4096
    $region17: #{tpu_custom_call.1} parent=1 // pred_fallthru
      _
    // Predicated region
    $region18: #{tpu_custom_call.1} parent=1 // pred_check
      _
    $region19: #{tpu_custom_call.1} parent=1 // pred_check_branch
      %44 = sbr.rel (0) target = $region21
    $region20: #{tpu_custom_call.1} parent=1 // pred_region
      %46 = dma.done [#allocation7], 1024
    $region21: #{tpu_custom_call.1} parent=1 // pred_fallthru
      _
    %p47 = scmp.eq.s32.totalorder 0, 0
    // Predicated region
    $region22: #{tpu_custom_call.1} parent=1 // pred_check
      %p48 = pneg %p47
    $region23: #{tpu_custom_call.1} parent=1 // pred_check_branch
      %50 = sbr.rel (%p48) target = $region25
    $region24: #{tpu_custom_call.1} parent=1 // pred_region
      %51 = vst [vmem:[#allocation2] sm:$0xff] 0.0
      %52 = vst [vmem:[#allocation2 + $0x8] sm:$0xff] 0.0
      %53 = vst [vmem:[#allocation2 + $0x10] sm:$0xff] 0.0
      %54 = vst [vmem:[#allocation2 + $0x18] sm:$0xff] 0.0
      %55 = vst [vmem:[#allocation2 + $0x20] sm:$0xff] 0.0
      %56 = vst [vmem:[#allocation2 + $0x28] sm:$0xff] 0.0
      %57 = vst [vmem:[#allocation2 + $0x30] sm:$0xff] 0.0
      %58 = vst [vmem:[#allocation2 + $0x38] sm:$0xff] 0.0
      %59 = vst [vmem:[#allocation2 + $0x40] sm:$0xff] 0.0
      %60 = vst [vmem:[#allocation2 + $0x48] sm:$0xff] 0.0
      %61 = vst [vmem:[#allocation2 + $0x50] sm:$0xff] 0.0
      %62 = vst [vmem:[#allocation2 + $0x58] sm:$0xff] 0.0
      %63 = vst [vmem:[#allocation2 + $0x60] sm:$0xff] 0.0
      %64 = vst [vmem:[#allocation2 + $0x68] sm:$0xff] 0.0
      %65 = vst [vmem:[#allocation2 + $0x70] sm:$0xff] 0.0
      %66 = vst [vmem:[#allocation2 + $0x78] sm:$0xff] 0.0
      %67 = vst [vmem:[#allocation2 + $0x80] sm:$0xff] 0.0
      %68 = vst [vmem:[#allocation2 + $0x88] sm:$0xff] 0.0
      %69 = vst [vmem:[#allocation2 + $0x90] sm:$0xff] 0.0
      %70 = vst [vmem:[#allocation2 + $0x98] sm:$0xff] 0.0
      %71 = vst [vmem:[#allocation2 + $0xa0] sm:$0xff] 0.0
      %72 = vst [vmem:[#allocation2 + $0xa8] sm:$0xff] 0.0
      %73 = vst [vmem:[#allocation2 + $0xb0] sm:$0xff] 0.0
      %74 = vst [vmem:[#allocation2 + $0xb8] sm:$0xff] 0.0
      %75 = vst [vmem:[#allocation2 + $0xc0] sm:$0xff] 0.0
      %76 = vst [vmem:[#allocation2 + $0xc8] sm:$0xff] 0.0
      %77 = vst [vmem:[#allocation2 + $0xd0] sm:$0xff] 0.0
      %78 = vst [vmem:[#allocation2 + $0xd8] sm:$0xff] 0.0
      %79 = vst [vmem:[#allocation2 + $0xe0] sm:$0xff] 0.0
      %80 = vst [vmem:[#allocation2 + $0xe8] sm:$0xff] 0.0
      %81 = vst [vmem:[#allocation2 + $0xf0] sm:$0xff] 0.0
      %82 = vst [vmem:[#allocation2 + $0xf8] sm:$0xff] 0.0
      %83 = vst [vmem:[#allocation2 + $0x100] sm:$0xff] 0.0
      %84 = vst [vmem:[#allocation2 + $0x108] sm:$0xff] 0.0
      %85 = vst [vmem:[#allocation2 + $0x110] sm:$0xff] 0.0
      %86 = vst [vmem:[#allocation2 + $0x118] sm:$0xff] 0.0
      %87 = vst [vmem:[#allocation2 + $0x120] sm:$0xff] 0.0
      %88 = vst [vmem:[#allocation2 + $0x128] sm:$0xff] 0.0
      %89 = vst [vmem:[#allocation2 + $0x130] sm:$0xff] 0.0
      %90 = vst [vmem:[#allocation2 + $0x138] sm:$0xff] 0.0
      %91 = vst [vmem:[#allocation2 + $0x140] sm:$0xff] 0.0
      %92 = vst [vmem:[#allocation2 + $0x148] sm:$0xff] 0.0
      %93 = vst [vmem:[#allocation2 + $0x150] sm:$0xff] 0.0
      %94 = vst [vmem:[#allocation2 + $0x158] sm:$0xff] 0.0
      %95 = vst [vmem:[#allocation2 + $0x160] sm:$0xff] 0.0
      %96 = vst [vmem:[#allocation2 + $0x168] sm:$0xff] 0.0
      %97 = vst [vmem:[#allocation2 + $0x170] sm:$0xff] 0.0
      %98 = vst [vmem:[#allocation2 + $0x178] sm:$0xff] 0.0
      %99 = vst [vmem:[#allocation2 + $0x180] sm:$0xff] 0.0
      %100 = vst [vmem:[#allocation2 + $0x188] sm:$0xff] 0.0
      %101 = vst [vmem:[#allocation2 + $0x190] sm:$0xff] 0.0
      %102 = vst [vmem:[#allocation2 + $0x198] sm:$0xff] 0.0
      %103 = vst [vmem:[#allocation2 + $0x1a0] sm:$0xff] 0.0
      %104 = vst [vmem:[#allocation2 + $0x1a8] sm:$0xff] 0.0
      %105 = vst [vmem:[#allocation2 + $0x1b0] sm:$0xff] 0.0
      %106 = vst [vmem:[#allocation2 + $0x1b8] sm:$0xff] 0.0
      %107 = vst [vmem:[#allocation2 + $0x1c0] sm:$0xff] 0.0
      %108 = vst [vmem:[#allocation2 + $0x1c8] sm:$0xff] 0.0
      %109 = vst [vmem:[#allocation2 + $0x1d0] sm:$0xff] 0.0
      %110 = vst [vmem:[#allocation2 + $0x1d8] sm:$0xff] 0.0
      %111 = vst [vmem:[#allocation2 + $0x1e0] sm:$0xff] 0.0
      %112 = vst [vmem:[#allocation2 + $0x1e8] sm:$0xff] 0.0
      %113 = vst [vmem:[#allocation2 + $0x1f0] sm:$0xff] 0.0
      %114 = vst [vmem:[#allocation2 + $0x1f8] sm:$0xff] 0.0
    $region25: #{tpu_custom_call.1} parent=1 // pred_fallthru
      _
    %v115 = vld [vmem:[#allocation2] sm:$0xff]
    %v116 = vld [vmem:[#allocation2 + $0x8] sm:$0xff]
    %v117 = vld [vmem:[#allocation2 + $0x10] sm:$0xff]
    %v118 = vld [vmem:[#allocation2 + $0x18] sm:$0xff]
    %v119 = vld [vmem:[#allocation2 + $0x20] sm:$0xff]
    %v120 = vld [vmem:[#allocation2 + $0x28] sm:$0xff]
    %v121 = vld [vmem:[#allocation2 + $0x30] sm:$0xff]
    %v122 = vld [vmem:[#allocation2 + $0x38] sm:$0xff]
    %v123 = vld [vmem:[#allocation2 + $0x40] sm:$0xff]
    %v124 = vld [vmem:[#allocation2 + $0x48] sm:$0xff]
    %v125 = vld [vmem:[#allocation2 + $0x50] sm:$0xff]
    %v126 = vld [vmem:[#allocation2 + $0x58] sm:$0xff]
    %v127 = vld [vmem:[#allocation2 + $0x60] sm:$0xff]
    %v128 = vld [vmem:[#allocation2 + $0x68] sm:$0xff]
    %v129 = vld [vmem:[#allocation2 + $0x70] sm:$0xff]
    %v130 = vld [vmem:[#allocation2 + $0x78] sm:$0xff]
    %v131 = vld [vmem:[#allocation2 + $0x80] sm:$0xff]
    %v132 = vld [vmem:[#allocation2 + $0x88] sm:$0xff]
    %v133 = vld [vmem:[#allocation2 + $0x90] sm:$0xff]
    %v134 = vld [vmem:[#allocation2 + $0x98] sm:$0xff]
    %v135 = vld [vmem:[#allocation2 + $0xa0] sm:$0xff]
    %v136 = vld [vmem:[#allocation2 + $0xa8] sm:$0xff]
    %v137 = vld [vmem:[#allocation2 + $0xb0] sm:$0xff]
    %v138 = vld [vmem:[#allocation2 + $0xb8] sm:$0xff]
    %v139 = vld [vmem:[#allocation2 + $0xc0] sm:$0xff]
    %v140 = vld [vmem:[#allocation2 + $0xc8] sm:$0xff]
    %v141 = vld [vmem:[#allocation2 + $0xd0] sm:$0xff]
    %v142 = vld [vmem:[#allocation2 + $0xd8] sm:$0xff]
    %v143 = vld [vmem:[#allocation2 + $0xe0] sm:$0xff]
    %v144 = vld [vmem:[#allocation2 + $0xe8] sm:$0xff]
    %v145 = vld [vmem:[#allocation2 + $0xf0] sm:$0xff]
    %v146 = vld [vmem:[#allocation2 + $0xf8] sm:$0xff]
    %v147 = vld [vmem:[#allocation2 + $0x100] sm:$0xff]
    %v148 = vld [vmem:[#allocation2 + $0x108] sm:$0xff]
    %v149 = vld [vmem:[#allocation2 + $0x110] sm:$0xff]
    %v150 = vld [vmem:[#allocation2 + $0x118] sm:$0xff]
    %v151 = vld [vmem:[#allocation2 + $0x120] sm:$0xff]
    %v152 = vld [vmem:[#allocation2 + $0x128] sm:$0xff]
    %v153 = vld [vmem:[#allocation2 + $0x130] sm:$0xff]
    %v154 = vld [vmem:[#allocation2 + $0x138] sm:$0xff]
    %v155 = vld [vmem:[#allocation2 + $0x140] sm:$0xff]
    %v156 = vld [vmem:[#allocation2 + $0x148] sm:$0xff]
    %v157 = vld [vmem:[#allocation2 + $0x150] sm:$0xff]
    %v158 = vld [vmem:[#allocation2 + $0x158] sm:$0xff]
    %v159 = vld [vmem:[#allocation2 + $0x160] sm:$0xff]
    %v160 = vld [vmem:[#allocation2 + $0x168] sm:$0xff]
    %v161 = vld [vmem:[#allocation2 + $0x170] sm:$0xff]
    %v162 = vld [vmem:[#allocation2 + $0x178] sm:$0xff]
    %v163 = vld [vmem:[#allocation2 + $0x180] sm:$0xff]
    %v164 = vld [vmem:[#allocation2 + $0x188] sm:$0xff]
    %v165 = vld [vmem:[#allocation2 + $0x190] sm:$0xff]
    %v166 = vld [vmem:[#allocation2 + $0x198] sm:$0xff]
    %v167 = vld [vmem:[#allocation2 + $0x1a0] sm:$0xff]
    %v168 = vld [vmem:[#allocation2 + $0x1a8] sm:$0xff]
    %v169 = vld [vmem:[#allocation2 + $0x1b0] sm:$0xff]
    %v170 = vld [vmem:[#allocation2 + $0x1b8] sm:$0xff]
    %v171 = vld [vmem:[#allocation2 + $0x1c0] sm:$0xff]
    %v172 = vld [vmem:[#allocation2 + $0x1c8] sm:$0xff]
    %v173 = vld [vmem:[#allocation2 + $0x1d0] sm:$0xff]
    %v174 = vld [vmem:[#allocation2 + $0x1d8] sm:$0xff]
    %v175 = vld [vmem:[#allocation2 + $0x1e0] sm:$0xff]
    %v176 = vld [vmem:[#allocation2 + $0x1e8] sm:$0xff]
    %v177 = vld [vmem:[#allocation2 + $0x1f0] sm:$0xff]
    %v178 = vld [vmem:[#allocation2 + $0x1f8] sm:$0xff]
    %v179 = vld [vmem:[#allocation3] sm:$0xf]
    %v180 = vld [vmem:[#allocation3 + $0x4] sm:$0xf]
    %v181 = vld [vmem:[#allocation3 + $0x8] sm:$0xf]
    %v182 = vld [vmem:[#allocation3 + $0xc] sm:$0xf]
    %v183 = vld [vmem:[#allocation3 + $0x10] sm:$0xf]
    %v184 = vld [vmem:[#allocation3 + $0x14] sm:$0xf]
    %v185 = vld [vmem:[#allocation3 + $0x18] sm:$0xf]
    %v186 = vld [vmem:[#allocation3 + $0x1c] sm:$0xf]
    %v187 = vld [vmem:[#allocation3 + $0x20] sm:$0xf]
    %v188 = vld [vmem:[#allocation3 + $0x24] sm:$0xf]
    %v189 = vld [vmem:[#allocation3 + $0x28] sm:$0xf]
    %v190 = vld [vmem:[#allocation3 + $0x2c] sm:$0xf]
    %v191 = vld [vmem:[#allocation3 + $0x30] sm:$0xf]
    %v192 = vld [vmem:[#allocation3 + $0x34] sm:$0xf]
    %v193 = vld [vmem:[#allocation3 + $0x38] sm:$0xf]
    %v194 = vld [vmem:[#allocation3 + $0x3c] sm:$0xf]
    %v195 = vld [vmem:[#allocation3 + $0x40] sm:$0xf]
    %v196 = vld [vmem:[#allocation3 + $0x44] sm:$0xf]
    %v197 = vld [vmem:[#allocation3 + $0x48] sm:$0xf]
    %v198 = vld [vmem:[#allocation3 + $0x4c] sm:$0xf]
    %v199 = vld [vmem:[#allocation3 + $0x50] sm:$0xf]
    %v200 = vld [vmem:[#allocation3 + $0x54] sm:$0xf]
    %v201 = vld [vmem:[#allocation3 + $0x58] sm:$0xf]
    %v202 = vld [vmem:[#allocation3 + $0x5c] sm:$0xf]
    %v203 = vld [vmem:[#allocation3 + $0x60] sm:$0xf]
    %v204 = vld [vmem:[#allocation3 + $0x64] sm:$0xf]
    %v205 = vld [vmem:[#allocation3 + $0x68] sm:$0xf]
    %v206 = vld [vmem:[#allocation3 + $0x6c] sm:$0xf]
    %v207 = vld [vmem:[#allocation3 + $0x70] sm:$0xf]
    %v208 = vld [vmem:[#allocation3 + $0x74] sm:$0xf]
    %v209 = vld [vmem:[#allocation3 + $0x78] sm:$0xf]
    %v210 = vld [vmem:[#allocation3 + $0x7c] sm:$0xf]
    %v211 = vld [vmem:[#allocation3 + $0x80] sm:$0xf]
    %v212 = vld [vmem:[#allocation3 + $0x84] sm:$0xf]
    %v213 = vld [vmem:[#allocation3 + $0x88] sm:$0xf]
    %v214 = vld [vmem:[#allocation3 + $0x8c] sm:$0xf]
    %v215 = vld [vmem:[#allocation3 + $0x90] sm:$0xf]
    %v216 = vld [vmem:[#allocation3 + $0x94] sm:$0xf]
    %v217 = vld [vmem:[#allocation3 + $0x98] sm:$0xf]
    %v218 = vld [vmem:[#allocation3 + $0x9c] sm:$0xf]
    %v219 = vld [vmem:[#allocation3 + $0xa0] sm:$0xf]
    %v220 = vld [vmem:[#allocation3 + $0xa4] sm:$0xf]
    %v221 = vld [vmem:[#allocation3 + $0xa8] sm:$0xf]
    %v222 = vld [vmem:[#allocation3 + $0xac] sm:$0xf]
    %v223 = vld [vmem:[#allocation3 + $0xb0] sm:$0xf]
    %v224 = vld [vmem:[#allocation3 + $0xb4] sm:$0xf]
    %v225 = vld [vmem:[#allocation3 + $0xb8] sm:$0xf]
    %v226 = vld [vmem:[#allocation3 + $0xbc] sm:$0xf]
    %v227 = vld [vmem:[#allocation3 + $0xc0] sm:$0xf]
    %v228 = vld [vmem:[#allocation3 + $0xc4] sm:$0xf]
    %v229 = vld [vmem:[#allocation3 + $0xc8] sm:$0xf]
    %v230 = vld [vmem:[#allocation3 + $0xcc] sm:$0xf]
    %v231 = vld [vmem:[#allocation3 + $0xd0] sm:$0xf]
    %v232 = vld [vmem:[#allocation3 + $0xd4] sm:$0xf]
    %v233 = vld [vmem:[#allocation3 + $0xd8] sm:$0xf]
    %v234 = vld [vmem:[#allocation3 + $0xdc] sm:$0xf]
    %v235 = vld [vmem:[#allocation3 + $0xe0] sm:$0xf]
    %v236 = vld [vmem:[#allocation3 + $0xe4] sm:$0xf]
    %v237 = vld [vmem:[#allocation3 + $0xe8] sm:$0xf]
    %v238 = vld [vmem:[#allocation3 + $0xec] sm:$0xf]
    %v239 = vld [vmem:[#allocation3 + $0xf0] sm:$0xf]
    %v240 = vld [vmem:[#allocation3 + $0xf4] sm:$0xf]
    %v241 = vld [vmem:[#allocation3 + $0xf8] sm:$0xf]
    %v242 = vld [vmem:[#allocation3 + $0xfc] sm:$0xf]
    %v243 = vld [vmem:[#allocation6] sm:$0xf]
    %v244 = vld [vmem:[#allocation6 + $0x4] sm:$0xf]
    %v245 = vld [vmem:[#allocation6 + $0x8] sm:$0xf]
    %v246 = vld [vmem:[#allocation6 + $0xc] sm:$0xf]
    %v247 = vld [vmem:[#allocation6 + $0x10] sm:$0xf]
    %v248 = vld [vmem:[#allocation6 + $0x14] sm:$0xf]
    %v249 = vld [vmem:[#allocation6 + $0x18] sm:$0xf]
    %v250 = vld [vmem:[#allocation6 + $0x1c] sm:$0xf]
    %v251 = vld [vmem:[#allocation6 + $0x20] sm:$0xf]
    %v252 = vld [vmem:[#allocation6 + $0x24] sm:$0xf]
    %v253 = vld [vmem:[#allocation6 + $0x28] sm:$0xf]
    %v254 = vld [vmem:[#allocation6 + $0x2c] sm:$0xf]
    %v255 = vld [vmem:[#allocation6 + $0x30] sm:$0xf]
    %v256 = vld [vmem:[#allocation6 + $0x34] sm:$0xf]
    %v257 = vld [vmem:[#allocation6 + $0x38] sm:$0xf]
    %v258 = vld [vmem:[#allocation6 + $0x3c] sm:$0xf]
    %v323 = vunpack.c.l.b16 %v179
    %v324 = vunpack.c.l.b16 %v180
    %v325 = vunpack.c.l.b16 %v181
    %v326 = vunpack.c.l.b16 %v182
    %v327 = vunpack.c.l.b16 %v183
    %v328 = vunpack.c.l.b16 %v184
    %v329 = vunpack.c.l.b16 %v185
    %v330 = vunpack.c.l.b16 %v186
    %v331 = vunpack.c.l.b16 %v187
    %v332 = vunpack.c.l.b16 %v188
    %v333 = vunpack.c.l.b16 %v189
    %v334 = vunpack.c.l.b16 %v190
    %v335 = vunpack.c.l.b16 %v191
    %v336 = vunpack.c.l.b16 %v192
    %v337 = vunpack.c.l.b16 %v193
    %v338 = vunpack.c.l.b16 %v194
    %v339 = vunpack.c.l.b16 %v195
    %v340 = vunpack.c.l.b16 %v196
    %v341 = vunpack.c.l.b16 %v197
    %v342 = vunpack.c.l.b16 %v198
    %v343 = vunpack.c.l.b16 %v199
    %v344 = vunpack.c.l.b16 %v200
    %v345 = vunpack.c.l.b16 %v201
    %v346 = vunpack.c.l.b16 %v202
    %v347 = vunpack.c.l.b16 %v203
    %v348 = vunpack.c.l.b16 %v204
    %v349 = vunpack.c.l.b16 %v205
    %v350 = vunpack.c.l.b16 %v206
    %v351 = vunpack.c.l.b16 %v207
    %v352 = vunpack.c.l.b16 %v208
    %v353 = vunpack.c.l.b16 %v209
    %v354 = vunpack.c.l.b16 %v210
    %v355 = vunpack.c.l.b16 %v211
    %v356 = vunpack.c.l.b16 %v212
    %v357 = vunpack.c.l.b16 %v213
    %v358 = vunpack.c.l.b16 %v214
    %v359 = vunpack.c.l.b16 %v215
    %v360 = vunpack.c.l.b16 %v216
    %v361 = vunpack.c.l.b16 %v217
    %v362 = vunpack.c.l.b16 %v218
    %v363 = vunpack.c.l.b16 %v219
    %v364 = vunpack.c.l.b16 %v220
    %v365 = vunpack.c.l.b16 %v221
    %v366 = vunpack.c.l.b16 %v222
    %v367 = vunpack.c.l.b16 %v223
    %v368 = vunpack.c.l.b16 %v224
    %v369 = vunpack.c.l.b16 %v225
    %v370 = vunpack.c.l.b16 %v226
    %v371 = vunpack.c.l.b16 %v227
    %v372 = vunpack.c.l.b16 %v228
    %v373 = vunpack.c.l.b16 %v229
    %v374 = vunpack.c.l.b16 %v230
    %v375 = vunpack.c.l.b16 %v231
    %v376 = vunpack.c.l.b16 %v232
    %v377 = vunpack.c.l.b16 %v233
    %v378 = vunpack.c.l.b16 %v234
    %v379 = vunpack.c.l.b16 %v235
    %v380 = vunpack.c.l.b16 %v236
    %v381 = vunpack.c.l.b16 %v237
    %v382 = vunpack.c.l.b16 %v238
    %v383 = vunpack.c.l.b16 %v239
    %v384 = vunpack.c.l.b16 %v240
    %v385 = vunpack.c.l.b16 %v241
    %v386 = vunpack.c.l.b16 %v242
    %v387 = vpack.c.b16 %v324, %v323
    %v388 = vpack.c.b16 %v326, %v325
    %v389 = vpack.c.b16 %v328, %v327
    %v390 = vpack.c.b16 %v330, %v329
    %v391 = vpack.c.b16 %v332, %v331
    %v392 = vpack.c.b16 %v334, %v333
    %v393 = vpack.c.b16 %v336, %v335
    %v394 = vpack.c.b16 %v338, %v337
    %v395 = vpack.c.b16 %v340, %v339
    %v396 = vpack.c.b16 %v342, %v341
    %v397 = vpack.c.b16 %v344, %v343
    %v398 = vpack.c.b16 %v346, %v345
    %v399 = vpack.c.b16 %v348, %v347
    %v400 = vpack.c.b16 %v350, %v349
    %v401 = vpack.c.b16 %v352, %v351
    %v402 = vpack.c.b16 %v354, %v353
    %v403 = vpack.c.b16 %v356, %v355
    %v404 = vpack.c.b16 %v358, %v357
    %v405 = vpack.c.b16 %v360, %v359
    %v406 = vpack.c.b16 %v362, %v361
    %v407 = vpack.c.b16 %v364, %v363
    %v408 = vpack.c.b16 %v366, %v365
    %v409 = vpack.c.b16 %v368, %v367
    %v410 = vpack.c.b16 %v370, %v369
    %v411 = vpack.c.b16 %v372, %v371
    %v412 = vpack.c.b16 %v374, %v373
    %v413 = vpack.c.b16 %v376, %v375
    %v414 = vpack.c.b16 %v378, %v377
    %v415 = vpack.c.b16 %v380, %v379
    %v416 = vpack.c.b16 %v382, %v381
    %v417 = vpack.c.b16 %v384, %v383
    %v418 = vpack.c.b16 %v386, %v385
    %v467 = vunpack.c.l.b16 %v243
    %v468 = vunpack.c.l.b16 %v244
    %v469 = vunpack.c.l.b16 %v245
    %v470 = vunpack.c.l.b16 %v246
    %v471 = vunpack.c.l.b16 %v247
    %v472 = vunpack.c.l.b16 %v248
    %v473 = vunpack.c.l.b16 %v249
    %v474 = vunpack.c.l.b16 %v250
    %v475 = vunpack.c.l.b16 %v251
    %v476 = vunpack.c.l.b16 %v252
    %v477 = vunpack.c.l.b16 %v253
    %v478 = vunpack.c.l.b16 %v254
    %v479 = vunpack.c.l.b16 %v255
    %v480 = vunpack.c.l.b16 %v256
    %v481 = vunpack.c.l.b16 %v257
    %v482 = vunpack.c.l.b16 %v258
    %v483 = vpack.c.b16 %v468, %v467
    %v484 = vpack.c.b16 %v470, %v469
    %v485 = vpack.c.b16 %v472, %v471
    %v486 = vpack.c.b16 %v474, %v473
    %v487 = vpack.c.b16 %v476, %v475
    %v488 = vpack.c.b16 %v478, %v477
    %v489 = vpack.c.b16 %v480, %v479
    %v490 = vpack.c.b16 %v482, %v481
    %499 = vmatpush.bf16.msra.mxu0 %v490
    %500 = vmatpush.bf16.msra.mxu0 %v489
    %501 = vmatpush.bf16.msra.mxu0 %v488
    %502 = vmatpush.bf16.msra.mxu0 %v487
    %503 = vmatpush.bf16.msra.mxu0 %v486
    %504 = vmatpush.bf16.msra.mxu0 %v485
    %505 = vmatpush.bf16.msra.mxu0 %v484
    %506 = vmatpush.bf16.msra.mxu0 %v483
    %507 = vmatmul.bf16.gmra.mxu0 %v387
    %v508 = vpop.f32.mrf.mxu0
    %v509 = vadd.f32 0.0, %v508
    %v510 = vpop.f32.mrf.mxu0
    %v511 = vadd.f32 0.0, %v510
    %512 = vmatmul.bf16.gmra.mxu0 %v388
    %v513 = vpop.f32.mrf.mxu0
    %v514 = vadd.f32 0.0, %v513
    %v515 = vpop.f32.mrf.mxu0
    %v516 = vadd.f32 0.0, %v515
    %517 = vmatmul.bf16.gmra.mxu0 %v389
    %v518 = vpop.f32.mrf.mxu0
    %v519 = vadd.f32 0.0, %v518
    %v520 = vpop.f32.mrf.mxu0
    %v521 = vadd.f32 0.0, %v520
    %522 = vmatmul.bf16.gmra.mxu0 %v390
    %v523 = vpop.f32.mrf.mxu0
    %v524 = vadd.f32 0.0, %v523
    %v525 = vpop.f32.mrf.mxu0
    %v526 = vadd.f32 0.0, %v525
    %527 = vmatmul.bf16.gmra.mxu0 %v391
    %v528 = vpop.f32.mrf.mxu0
    %v529 = vadd.f32 0.0, %v528
    %v530 = vpop.f32.mrf.mxu0
    %v531 = vadd.f32 0.0, %v530
    %532 = vmatmul.bf16.gmra.mxu0 %v392
    %v533 = vpop.f32.mrf.mxu0
    %v534 = vadd.f32 0.0, %v533
    %v535 = vpop.f32.mrf.mxu0
    %v536 = vadd.f32 0.0, %v535
    %537 = vmatmul.bf16.gmra.mxu0 %v393
    %v538 = vpop.f32.mrf.mxu0
    %v539 = vadd.f32 0.0, %v538
    %v540 = vpop.f32.mrf.mxu0
    %v541 = vadd.f32 0.0, %v540
    %542 = vmatmul.bf16.gmra.mxu0 %v394
    %v543 = vpop.f32.mrf.mxu0
    %v544 = vadd.f32 0.0, %v543
    %v545 = vpop.f32.mrf.mxu0
    %v546 = vadd.f32 0.0, %v545
    %547 = vmatmul.bf16.gmra.mxu0 %v395
    %v548 = vpop.f32.mrf.mxu0
    %v549 = vadd.f32 0.0, %v548
    %v550 = vpop.f32.mrf.mxu0
    %v551 = vadd.f32 0.0, %v550
    %552 = vmatmul.bf16.gmra.mxu0 %v396
    %v553 = vpop.f32.mrf.mxu0
    %v554 = vadd.f32 0.0, %v553
    %v555 = vpop.f32.mrf.mxu0
    %v556 = vadd.f32 0.0, %v555
    %557 = vmatmul.bf16.gmra.mxu0 %v397
    %v558 = vpop.f32.mrf.mxu0
    %v559 = vadd.f32 0.0, %v558
    %v560 = vpop.f32.mrf.mxu0
    %v561 = vadd.f32 0.0, %v560
    %562 = vmatmul.bf16.gmra.mxu0 %v398
    %v563 = vpop.f32.mrf.mxu0
    %v564 = vadd.f32 0.0, %v563
    %v565 = vpop.f32.mrf.mxu0
    %v566 = vadd.f32 0.0, %v565
    %567 = vmatmul.bf16.gmra.mxu0 %v399
    %v568 = vpop.f32.mrf.mxu0
    %v569 = vadd.f32 0.0, %v568
    %v570 = vpop.f32.mrf.mxu0
    %v571 = vadd.f32 0.0, %v570
    %572 = vmatmul.bf16.gmra.mxu0 %v400
    %v573 = vpop.f32.mrf.mxu0
    %v574 = vadd.f32 0.0, %v573
    %v575 = vpop.f32.mrf.mxu0
    %v576 = vadd.f32 0.0, %v575
    %577 = vmatmul.bf16.gmra.mxu0 %v401
    %v578 = vpop.f32.mrf.mxu0
    %v579 = vadd.f32 0.0, %v578
    %v580 = vpop.f32.mrf.mxu0
    %v581 = vadd.f32 0.0, %v580
    %582 = vmatmul.bf16.gmra.mxu0 %v402
    %v583 = vpop.f32.mrf.mxu0
    %v584 = vadd.f32 0.0, %v583
    %v585 = vpop.f32.mrf.mxu0
    %v586 = vadd.f32 0.0, %v585
    %587 = vmatmul.bf16.gmra.mxu0 %v403
    %v588 = vpop.f32.mrf.mxu0
    %v589 = vadd.f32 0.0, %v588
    %v590 = vpop.f32.mrf.mxu0
    %v591 = vadd.f32 0.0, %v590
    %592 = vmatmul.bf16.gmra.mxu0 %v404
    %v593 = vpop.f32.mrf.mxu0
    %v594 = vadd.f32 0.0, %v593
    %v595 = vpop.f32.mrf.mxu0
    %v596 = vadd.f32 0.0, %v595
    %597 = vmatmul.bf16.gmra.mxu0 %v405
    %v598 = vpop.f32.mrf.mxu0
    %v599 = vadd.f32 0.0, %v598
    %v600 = vpop.f32.mrf.mxu0
    %v601 = vadd.f32 0.0, %v600
    %602 = vmatmul.bf16.gmra.mxu0 %v406
    %v603 = vpop.f32.mrf.mxu0
    %v604 = vadd.f32 0.0, %v603
    %v605 = vpop.f32.mrf.mxu0
    %v606 = vadd.f32 0.0, %v605
    %607 = vmatmul.bf16.gmra.mxu0 %v407
    %v608 = vpop.f32.mrf.mxu0
    %v609 = vadd.f32 0.0, %v608
    %v610 = vpop.f32.mrf.mxu0
    %v611 = vadd.f32 0.0, %v610
    %612 = vmatmul.bf16.gmra.mxu0 %v408
    %v613 = vpop.f32.mrf.mxu0
    %v614 = vadd.f32 0.0, %v613
    %v615 = vpop.f32.mrf.mxu0
    %v616 = vadd.f32 0.0, %v615
    %617 = vmatmul.bf16.gmra.mxu0 %v409
    %v618 = vpop.f32.mrf.mxu0
    %v619 = vadd.f32 0.0, %v618
    %v620 = vpop.f32.mrf.mxu0
    %v621 = vadd.f32 0.0, %v620
    %622 = vmatmul.bf16.gmra.mxu0 %v410
    %v623 = vpop.f32.mrf.mxu0
    %v624 = vadd.f32 0.0, %v623
    %v625 = vpop.f32.mrf.mxu0
    %v626 = vadd.f32 0.0, %v625
    %627 = vmatmul.bf16.gmra.mxu0 %v411
    %v628 = vpop.f32.mrf.mxu0
    %v629 = vadd.f32 0.0, %v628
    %v630 = vpop.f32.mrf.mxu0
    %v631 = vadd.f32 0.0, %v630
    %632 = vmatmul.bf16.gmra.mxu0 %v412
    %v633 = vpop.f32.mrf.mxu0
    %v634 = vadd.f32 0.0, %v633
    %v635 = vpop.f32.mrf.mxu0
    %v636 = vadd.f32 0.0, %v635
    %637 = vmatmul.bf16.gmra.mxu0 %v413
    %v638 = vpop.f32.mrf.mxu0
    %v639 = vadd.f32 0.0, %v638
    %v640 = vpop.f32.mrf.mxu0
    %v641 = vadd.f32 0.0, %v640
    %642 = vmatmul.bf16.gmra.mxu0 %v414
    %v643 = vpop.f32.mrf.mxu0
    %v644 = vadd.f32 0.0, %v643
    %v645 = vpop.f32.mrf.mxu0
    %v646 = vadd.f32 0.0, %v645
    %647 = vmatmul.bf16.gmra.mxu0 %v415
    %v648 = vpop.f32.mrf.mxu0
    %v649 = vadd.f32 0.0, %v648
    %v650 = vpop.f32.mrf.mxu0
    %v651 = vadd.f32 0.0, %v650
    %652 = vmatmul.bf16.gmra.mxu0 %v416
    %v653 = vpop.f32.mrf.mxu0
    %v654 = vadd.f32 0.0, %v653
    %v655 = vpop.f32.mrf.mxu0
    %v656 = vadd.f32 0.0, %v655
    %657 = vmatmul.bf16.gmra.mxu0 %v417
    %v658 = vpop.f32.mrf.mxu0
    %v659 = vadd.f32 0.0, %v658
    %v660 = vpop.f32.mrf.mxu0
    %v661 = vadd.f32 0.0, %v660
    %662 = vmatmul.bf16.gmra.mxu0 %v418
    %v663 = vpop.f32.mrf.mxu0
    %v664 = vadd.f32 0.0, %v663
    %v665 = vpop.f32.mrf.mxu0
    %v666 = vadd.f32 0.0, %v665
    %667 = vdwg.mxu0
    %v668 = vadd.f32 %v115, %v509
    %v669 = vadd.f32 %v116, %v511
    %v670 = vadd.f32 %v117, %v514
    %v671 = vadd.f32 %v118, %v516
    %v672 = vadd.f32 %v119, %v519
    %v673 = vadd.f32 %v120, %v521
    %v674 = vadd.f32 %v121, %v524
    %v675 = vadd.f32 %v122, %v526
    %v676 = vadd.f32 %v123, %v529
    %v677 = vadd.f32 %v124, %v531
    %v678 = vadd.f32 %v125, %v534
    %v679 = vadd.f32 %v126, %v536
    %v680 = vadd.f32 %v127, %v539
    %v681 = vadd.f32 %v128, %v541
    %v682 = vadd.f32 %v129, %v544
    %v683 = vadd.f32 %v130, %v546
    %v684 = vadd.f32 %v131, %v549
    %v685 = vadd.f32 %v132, %v551
    %v686 = vadd.f32 %v133, %v554
    %v687 = vadd.f32 %v134, %v556
    %v688 = vadd.f32 %v135, %v559
    %v689 = vadd.f32 %v136, %v561
    %v690 = vadd.f32 %v137, %v564
    %v691 = vadd.f32 %v138, %v566
    %v692 = vadd.f32 %v139, %v569
    %v693 = vadd.f32 %v140, %v571
    %v694 = vadd.f32 %v141, %v574
    %v695 = vadd.f32 %v142, %v576
    %v696 = vadd.f32 %v143, %v579
    %v697 = vadd.f32 %v144, %v581
    %v698 = vadd.f32 %v145, %v584
    %v699 = vadd.f32 %v146, %v586
    %v700 = vadd.f32 %v147, %v589
    %v701 = vadd.f32 %v148, %v591
    %v702 = vadd.f32 %v149, %v594
    %v703 = vadd.f32 %v150, %v596
    %v704 = vadd.f32 %v151, %v599
    %v705 = vadd.f32 %v152, %v601
    %v706 = vadd.f32 %v153, %v604
    %v707 = vadd.f32 %v154, %v606
    %v708 = vadd.f32 %v155, %v609
    %v709 = vadd.f32 %v156, %v611
    %v710 = vadd.f32 %v157, %v614
    %v711 = vadd.f32 %v158, %v616
    %v712 = vadd.f32 %v159, %v619
    %v713 = vadd.f32 %v160, %v621
    %v714 = vadd.f32 %v161, %v624
    %v715 = vadd.f32 %v162, %v626
    %v716 = vadd.f32 %v163, %v629
    %v717 = vadd.f32 %v164, %v631
    %v718 = vadd.f32 %v165, %v634
    %v719 = vadd.f32 %v166, %v636
    %v720 = vadd.f32 %v167, %v639
    %v721 = vadd.f32 %v168, %v641
    %v722 = vadd.f32 %v169, %v644
    %v723 = vadd.f32 %v170, %v646
    %v724 = vadd.f32 %v171, %v649
    %v725 = vadd.f32 %v172, %v651
    %v726 = vadd.f32 %v173, %v654
    %v727 = vadd.f32 %v174, %v656
    %v728 = vadd.f32 %v175, %v659
    %v729 = vadd.f32 %v176, %v661
    %v730 = vadd.f32 %v177, %v664
    %v731 = vadd.f32 %v178, %v666
    %732 = vst [vmem:[#allocation2] sm:$0xff] %v668
    %733 = vst [vmem:[#allocation2 + $0x8] sm:$0xff] %v669
    %734 = vst [vmem:[#allocation2 + $0x10] sm:$0xff] %v670
    %735 = vst [vmem:[#allocation2 + $0x18] sm:$0xff] %v671
    %736 = vst [vmem:[#allocation2 + $0x20] sm:$0xff] %v672
    %737 = vst [vmem:[#allocation2 + $0x28] sm:$0xff] %v673
    %738 = vst [vmem:[#allocation2 + $0x30] sm:$0xff] %v674
    %739 = vst [vmem:[#allocation2 + $0x38] sm:$0xff] %v675
    %740 = vst [vmem:[#allocation2 + $0x40] sm:$0xff] %v676
    %741 = vst [vmem:[#allocation2 + $0x48] sm:$0xff] %v677
    %742 = vst [vmem:[#allocation2 + $0x50] sm:$0xff] %v678
    %743 = vst [vmem:[#allocation2 + $0x58] sm:$0xff] %v679
    %744 = vst [vmem:[#allocation2 + $0x60] sm:$0xff] %v680
    %745 = vst [vmem:[#allocation2 + $0x68] sm:$0xff] %v681
    %746 = vst [vmem:[#allocation2 + $0x70] sm:$0xff] %v682
    %747 = vst [vmem:[#allocation2 + $0x78] sm:$0xff] %v683
    %748 = vst [vmem:[#allocation2 + $0x80] sm:$0xff] %v684
    %749 = vst [vmem:[#allocation2 + $0x88] sm:$0xff] %v685
    %750 = vst [vmem:[#allocation2 + $0x90] sm:$0xff] %v686
    %751 = vst [vmem:[#allocation2 + $0x98] sm:$0xff] %v687
    %752 = vst [vmem:[#allocation2 + $0xa0] sm:$0xff] %v688
    %753 = vst [vmem:[#allocation2 + $0xa8] sm:$0xff] %v689
    %754 = vst [vmem:[#allocation2 + $0xb0] sm:$0xff] %v690
    %755 = vst [vmem:[#allocation2 + $0xb8] sm:$0xff] %v691
    %756 = vst [vmem:[#allocation2 + $0xc0] sm:$0xff] %v692
    %757 = vst [vmem:[#allocation2 + $0xc8] sm:$0xff] %v693
    %758 = vst [vmem:[#allocation2 + $0xd0] sm:$0xff] %v694
    %759 = vst [vmem:[#allocation2 + $0xd8] sm:$0xff] %v695
    %760 = vst [vmem:[#allocation2 + $0xe0] sm:$0xff] %v696
    %761 = vst [vmem:[#allocation2 + $0xe8] sm:$0xff] %v697
    %762 = vst [vmem:[#allocation2 + $0xf0] sm:$0xff] %v698
    %763 = vst [vmem:[#allocation2 + $0xf8] sm:$0xff] %v699
    %764 = vst [vmem:[#allocation2 + $0x100] sm:$0xff] %v700
    %765 = vst [vmem:[#allocation2 + $0x108] sm:$0xff] %v701
    %766 = vst [vmem:[#allocation2 + $0x110] sm:$0xff] %v702
    %767 = vst [vmem:[#allocation2 + $0x118] sm:$0xff] %v703
    %768 = vst [vmem:[#allocation2 + $0x120] sm:$0xff] %v704
    %769 = vst [vmem:[#allocation2 + $0x128] sm:$0xff] %v705
    %770 = vst [vmem:[#allocation2 + $0x130] sm:$0xff] %v706
    %771 = vst [vmem:[#allocation2 + $0x138] sm:$0xff] %v707
    %772 = vst [vmem:[#allocation2 + $0x140] sm:$0xff] %v708
    %773 = vst [vmem:[#allocation2 + $0x148] sm:$0xff] %v709
    %774 = vst [vmem:[#allocation2 + $0x150] sm:$0xff] %v710
    %775 = vst [vmem:[#allocation2 + $0x158] sm:$0xff] %v711
    %776 = vst [vmem:[#allocation2 + $0x160] sm:$0xff] %v712
    %777 = vst [vmem:[#allocation2 + $0x168] sm:$0xff] %v713
    %778 = vst [vmem:[#allocation2 + $0x170] sm:$0xff] %v714
    %779 = vst [vmem:[#allocation2 + $0x178] sm:$0xff] %v715
    %780 = vst [vmem:[#allocation2 + $0x180] sm:$0xff] %v716
    %781 = vst [vmem:[#allocation2 + $0x188] sm:$0xff] %v717
    %782 = vst [vmem:[#allocation2 + $0x190] sm:$0xff] %v718
    %783 = vst [vmem:[#allocation2 + $0x198] sm:$0xff] %v719
    %784 = vst [vmem:[#allocation2 + $0x1a0] sm:$0xff] %v720
    %785 = vst [vmem:[#allocation2 + $0x1a8] sm:$0xff] %v721
    %786 = vst [vmem:[#allocation2 + $0x1b0] sm:$0xff] %v722
    %787 = vst [vmem:[#allocation2 + $0x1b8] sm:$0xff] %v723
    %788 = vst [vmem:[#allocation2 + $0x1c0] sm:$0xff] %v724
    %789 = vst [vmem:[#allocation2 + $0x1c8] sm:$0xff] %v725
    %790 = vst [vmem:[#allocation2 + $0x1d0] sm:$0xff] %v726
    %791 = vst [vmem:[#allocation2 + $0x1d8] sm:$0xff] %v727
    %792 = vst [vmem:[#allocation2 + $0x1e0] sm:$0xff] %v728
    %793 = vst [vmem:[#allocation2 + $0x1e8] sm:$0xff] %v729
    %794 = vst [vmem:[#allocation2 + $0x1f0] sm:$0xff] %v730
    %795 = vst [vmem:[#allocation2 + $0x1f8] sm:$0xff] %v731
    // Predicated region
    $region26: #{tpu_custom_call.1} parent=1 // pred_check
      %p796 = pneg %p47
    $region27: #{tpu_custom_call.1} parent=1 // pred_check_branch
      %798 = sbr.rel (%p796) target = $region29
    $region28: #{tpu_custom_call.1} parent=1 // pred_region
      %v799 = vld [vmem:[#allocation2] sm:$0xff]
      %v800 = vld [vmem:[#allocation2 + $0x8] sm:$0xff]
      %v801 = vld [vmem:[#allocation2 + $0x10] sm:$0xff]
      %v802 = vld [vmem:[#allocation2 + $0x18] sm:$0xff]
      %v803 = vld [vmem:[#allocation2 + $0x20] sm:$0xff]
      %v804 = vld [vmem:[#allocation2 + $0x28] sm:$0xff]
      %v805 = vld [vmem:[#allocation2 + $0x30] sm:$0xff]
      %v806 = vld [vmem:[#allocation2 + $0x38] sm:$0xff]
      %v807 = vld [vmem:[#allocation2 + $0x40] sm:$0xff]
      %v808 = vld [vmem:[#allocation2 + $0x48] sm:$0xff]
      %v809 = vld [vmem:[#allocation2 + $0x50] sm:$0xff]
      %v810 = vld [vmem:[#allocation2 + $0x58] sm:$0xff]
      %v811 = vld [vmem:[#allocation2 + $0x60] sm:$0xff]
      %v812 = vld [vmem:[#allocation2 + $0x68] sm:$0xff]
      %v813 = vld [vmem:[#allocation2 + $0x70] sm:$0xff]
      %v814 = vld [vmem:[#allocation2 + $0x78] sm:$0xff]
      %v815 = vld [vmem:[#allocation2 + $0x80] sm:$0xff]
      %v816 = vld [vmem:[#allocation2 + $0x88] sm:$0xff]
      %v817 = vld [vmem:[#allocation2 + $0x90] sm:$0xff]
      %v818 = vld [vmem:[#allocation2 + $0x98] sm:$0xff]
      %v819 = vld [vmem:[#allocation2 + $0xa0] sm:$0xff]
      %v820 = vld [vmem:[#allocation2 + $0xa8] sm:$0xff]
      %v821 = vld [vmem:[#allocation2 + $0xb0] sm:$0xff]
      %v822 = vld [vmem:[#allocation2 + $0xb8] sm:$0xff]
      %v823 = vld [vmem:[#allocation2 + $0xc0] sm:$0xff]
      %v824 = vld [vmem:[#allocation2 + $0xc8] sm:$0xff]
      %v825 = vld [vmem:[#allocation2 + $0xd0] sm:$0xff]
      %v826 = vld [vmem:[#allocation2 + $0xd8] sm:$0xff]
      %v827 = vld [vmem:[#allocation2 + $0xe0] sm:$0xff]
      %v828 = vld [vmem:[#allocation2 + $0xe8] sm:$0xff]
      %v829 = vld [vmem:[#allocation2 + $0xf0] sm:$0xff]
      %v830 = vld [vmem:[#allocation2 + $0xf8] sm:$0xff]
      %v831 = vld [vmem:[#allocation2 + $0x100] sm:$0xff]
      %v832 = vld [vmem:[#allocation2 + $0x108] sm:$0xff]
      %v833 = vld [vmem:[#allocation2 + $0x110] sm:$0xff]
      %v834 = vld [vmem:[#allocation2 + $0x118] sm:$0xff]
      %v835 = vld [vmem:[#allocation2 + $0x120] sm:$0xff]
      %v836 = vld [vmem:[#allocation2 + $0x128] sm:$0xff]
      %v837 = vld [vmem:[#allocation2 + $0x130] sm:$0xff]
      %v838 = vld [vmem:[#allocation2 + $0x138] sm:$0xff]
      %v839 = vld [vmem:[#allocation2 + $0x140] sm:$0xff]
      %v840 = vld [vmem:[#allocation2 + $0x148] sm:$0xff]
      %v841 = vld [vmem:[#allocation2 + $0x150] sm:$0xff]
      %v842 = vld [vmem:[#allocation2 + $0x158] sm:$0xff]
      %v843 = vld [vmem:[#allocation2 + $0x160] sm:$0xff]
      %v844 = vld [vmem:[#allocation2 + $0x168] sm:$0xff]
      %v845 = vld [vmem:[#allocation2 + $0x170] sm:$0xff]
      %v846 = vld [vmem:[#allocation2 + $0x178] sm:$0xff]
      %v847 = vld [vmem:[#allocation2 + $0x180] sm:$0xff]
      %v848 = vld [vmem:[#allocation2 + $0x188] sm:$0xff]
      %v849 = vld [vmem:[#allocation2 + $0x190] sm:$0xff]
      %v850 = vld [vmem:[#allocation2 + $0x198] sm:$0xff]
      %v851 = vld [vmem:[#allocation2 + $0x1a0] sm:$0xff]
      %v852 = vld [vmem:[#allocation2 + $0x1a8] sm:$0xff]
      %v853 = vld [vmem:[#allocation2 + $0x1b0] sm:$0xff]
      %v854 = vld [vmem:[#allocation2 + $0x1b8] sm:$0xff]
      %v855 = vld [vmem:[#allocation2 + $0x1c0] sm:$0xff]
      %v856 = vld [vmem:[#allocation2 + $0x1c8] sm:$0xff]
      %v857 = vld [vmem:[#allocation2 + $0x1d0] sm:$0xff]
      %v858 = vld [vmem:[#allocation2 + $0x1d8] sm:$0xff]
      %v859 = vld [vmem:[#allocation2 + $0x1e0] sm:$0xff]
      %v860 = vld [vmem:[#allocation2 + $0x1e8] sm:$0xff]
      %v861 = vld [vmem:[#allocation2 + $0x1f0] sm:$0xff]
      %v862 = vld [vmem:[#allocation2 + $0x1f8] sm:$0xff]
      %v863 = vld [vmem:[%s2] sm:$0x1]
      %v865 = vperm.slane %v863, 0
      %v867 = vadd.f32 %v799, %v865
      %v868 = vadd.f32 %v800, %v865
      %v869 = vadd.f32 %v801, %v865
      %v870 = vadd.f32 %v802, %v865
      %v871 = vadd.f32 %v803, %v865
      %v872 = vadd.f32 %v804, %v865
      %v873 = vadd.f32 %v805, %v865
      %v874 = vadd.f32 %v806, %v865
      %v875 = vadd.f32 %v807, %v865
      %v876 = vadd.f32 %v808, %v865
      %v877 = vadd.f32 %v809, %v865
      %v878 = vadd.f32 %v810, %v865
      %v879 = vadd.f32 %v811, %v865
      %v880 = vadd.f32 %v812, %v865
      %v881 = vadd.f32 %v813, %v865
      %v882 = vadd.f32 %v814, %v865
      %v883 = vadd.f32 %v815, %v865
      %v884 = vadd.f32 %v816, %v865
      %v885 = vadd.f32 %v817, %v865
      %v886 = vadd.f32 %v818, %v865
      %v887 = vadd.f32 %v819, %v865
      %v888 = vadd.f32 %v820, %v865
      %v889 = vadd.f32 %v821, %v865
      %v890 = vadd.f32 %v822, %v865
      %v891 = vadd.f32 %v823, %v865
      %v892 = vadd.f32 %v824, %v865
      %v893 = vadd.f32 %v825, %v865
      %v894 = vadd.f32 %v826, %v865
      %v895 = vadd.f32 %v827, %v865
      %v896 = vadd.f32 %v828, %v865
      %v897 = vadd.f32 %v829, %v865
      %v898 = vadd.f32 %v830, %v865
      %v899 = vadd.f32 %v831, %v865
      %v900 = vadd.f32 %v832, %v865
      %v901 = vadd.f32 %v833, %v865
      %v902 = vadd.f32 %v834, %v865
      %v903 = vadd.f32 %v835, %v865
      %v904 = vadd.f32 %v836, %v865
      %v905 = vadd.f32 %v837, %v865
      %v906 = vadd.f32 %v838, %v865
      %v907 = vadd.f32 %v839, %v865
      %v908 = vadd.f32 %v840, %v865
      %v909 = vadd.f32 %v841, %v865
      %v910 = vadd.f32 %v842, %v865
      %v911 = vadd.f32 %v843, %v865
      %v912 = vadd.f32 %v844, %v865
      %v913 = vadd.f32 %v845, %v865
      %v914 = vadd.f32 %v846, %v865
      %v915 = vadd.f32 %v847, %v865
      %v916 = vadd.f32 %v848, %v865
      %v917 = vadd.f32 %v849, %v865
      %v918 = vadd.f32 %v850, %v865
      %v919 = vadd.f32 %v851, %v865
      %v920 = vadd.f32 %v852, %v865
      %v921 = vadd.f32 %v853, %v865
      %v922 = vadd.f32 %v854, %v865
      %v923 = vadd.f32 %v855, %v865
      %v924 = vadd.f32 %v856, %v865
      %v925 = vadd.f32 %v857, %v865
      %v926 = vadd.f32 %v858, %v865
      %v927 = vadd.f32 %v859, %v865
      %v928 = vadd.f32 %v860, %v865
      %v929 = vadd.f32 %v861, %v865
      %v930 = vadd.f32 %v862, %v865
      %v931 = vxor.u32 %v867, 2147483648
      %v932 = vxor.u32 %v868, 2147483648
      %v933 = vxor.u32 %v869, 2147483648
      %v934 = vxor.u32 %v870, 2147483648
      %v935 = vxor.u32 %v871, 2147483648
      %v936 = vxor.u32 %v872, 2147483648
      %v937 = vxor.u32 %v873, 2147483648
      %v938 = vxor.u32 %v874, 2147483648
      %v939 = vxor.u32 %v875, 2147483648
      %v940 = vxor.u32 %v876, 2147483648
      %v941 = vxor.u32 %v877, 2147483648
      %v942 = vxor.u32 %v878, 2147483648
      %v943 = vxor.u32 %v879, 2147483648
      %v944 = vxor.u32 %v880, 2147483648
      %v945 = vxor.u32 %v881, 2147483648
      %v946 = vxor.u32 %v882, 2147483648
      %v947 = vxor.u32 %v883, 2147483648
      %v948 = vxor.u32 %v884, 2147483648
      %v949 = vxor.u32 %v885, 2147483648
      %v950 = vxor.u32 %v886, 2147483648
      %v951 = vxor.u32 %v887, 2147483648
      %v952 = vxor.u32 %v888, 2147483648
      %v953 = vxor.u32 %v889, 2147483648
      %v954 = vxor.u32 %v890, 2147483648
      %v955 = vxor.u32 %v891, 2147483648
      %v956 = vxor.u32 %v892, 2147483648
      %v957 = vxor.u32 %v893, 2147483648
      %v958 = vxor.u32 %v894, 2147483648
      %v959 = vxor.u32 %v895, 2147483648
      %v960 = vxor.u32 %v896, 2147483648
      %v961 = vxor.u32 %v897, 2147483648
      %v962 = vxor.u32 %v898, 2147483648
      %v963 = vxor.u32 %v899, 2147483648
      %v964 = vxor.u32 %v900, 2147483648
      %v965 = vxor.u32 %v901, 2147483648
      %v966 = vxor.u32 %v902, 2147483648
      %v967 = vxor.u32 %v903, 2147483648
      %v968 = vxor.u32 %v904, 2147483648
      %v969 = vxor.u32 %v905, 2147483648
      %v970 = vxor.u32 %v906, 2147483648
      %v971 = vxor.u32 %v907, 2147483648
      %v972 = vxor.u32 %v908, 2147483648
      %v973 = vxor.u32 %v909, 2147483648
      %v974 = vxor.u32 %v910, 2147483648
      %v975 = vxor.u32 %v911, 2147483648
      %v976 = vxor.u32 %v912, 2147483648
      %v977 = vxor.u32 %v913, 2147483648
      %v978 = vxor.u32 %v914, 2147483648
      %v979 = vxor.u32 %v915, 2147483648
      %v980 = vxor.u32 %v916, 2147483648
      %v981 = vxor.u32 %v917, 2147483648
      %v982 = vxor.u32 %v918, 2147483648
      %v983 = vxor.u32 %v919, 2147483648
      %v984 = vxor.u32 %v920, 2147483648
      %v985 = vxor.u32 %v921, 2147483648
      %v986 = vxor.u32 %v922, 2147483648
      %v987 = vxor.u32 %v923, 2147483648
      %v988 = vxor.u32 %v924, 2147483648
      %v989 = vxor.u32 %v925, 2147483648
      %v990 = vxor.u32 %v926, 2147483648
      %v991 = vxor.u32 %v927, 2147483648
      %v992 = vxor.u32 %v928, 2147483648
      %v993 = vxor.u32 %v929, 2147483648
      %v994 = vxor.u32 %v930, 2147483648
      %v995 = vmul.f32 %v931, 1.442695
      %v996 = vpow.pop %v995
      %v997 = vmul.f32 %v932, 1.442695
      %v998 = vpow.pop %v997
      %v999 = vmul.f32 %v933, 1.442695
      %v1000 = vpow.pop %v999
      %v1001 = vmul.f32 %v934, 1.442695
      %v1002 = vpow.pop %v1001
      %v1003 = vmul.f32 %v935, 1.442695
      %v1004 = vpow.pop %v1003
      %v1005 = vmul.f32 %v936, 1.442695
      %v1006 = vpow.pop %v1005
      %v1007 = vmul.f32 %v937, 1.442695
      %v1008 = vpow.pop %v1007
      %v1009 = vmul.f32 %v938, 1.442695
      %v1010 = vpow.pop %v1009
      %v1011 = vmul.f32 %v939, 1.442695
      %v1012 = vpow.pop %v1011
      %v1013 = vmul.f32 %v940, 1.442695
      %v1014 = vpow.pop %v1013
      %v1015 = vmul.f32 %v941, 1.442695
      %v1016 = vpow.pop %v1015
      %v1017 = vmul.f32 %v942, 1.442695
      %v1018 = vpow.pop %v1017
      %v1019 = vmul.f32 %v943, 1.442695
      %v1020 = vpow.pop %v1019
      %v1021 = vmul.f32 %v944, 1.442695
      %v1022 = vpow.pop %v1021
      %v1023 = vmul.f32 %v945, 1.442695
      %v1024 = vpow.pop %v1023
      %v1025 = vmul.f32 %v946, 1.442695
      %v1026 = vpow.pop %v1025
      %v1027 = vmul.f32 %v947, 1.442695
      %v1028 = vpow.pop %v1027
      %v1029 = vmul.f32 %v948, 1.442695
      %v1030 = vpow.pop %v1029
      %v1031 = vmul.f32 %v949, 1.442695
      %v1032 = vpow.pop %v1031
      %v1033 = vmul.f32 %v950, 1.442695
      %v1034 = vpow.pop %v1033
      %v1035 = vmul.f32 %v951, 1.442695
      %v1036 = vpow.pop %v1035
      %v1037 = vmul.f32 %v952, 1.442695
      %v1038 = vpow.pop %v1037
      %v1039 = vmul.f32 %v953, 1.442695
      %v1040 = vpow.pop %v1039
      %v1041 = vmul.f32 %v954, 1.442695
      %v1042 = vpow.pop %v1041
      %v1043 = vmul.f32 %v955, 1.442695
      %v1044 = vpow.pop %v1043
      %v1045 = vmul.f32 %v956, 1.442695
      %v1046 = vpow.pop %v1045
      %v1047 = vmul.f32 %v957, 1.442695
      %v1048 = vpow.pop %v1047
      %v1049 = vmul.f32 %v958, 1.442695
      %v1050 = vpow.pop %v1049
      %v1051 = vmul.f32 %v959, 1.442695
      %v1052 = vpow.pop %v1051
      %v1053 = vmul.f32 %v960, 1.442695
      %v1054 = vpow.pop %v1053
      %v1055 = vmul.f32 %v961, 1.442695
      %v1056 = vpow.pop %v1055
      %v1057 = vmul.f32 %v962, 1.442695
      %v1058 = vpow.pop %v1057
      %v1059 = vmul.f32 %v963, 1.442695
      %v1060 = vpow.pop %v1059
      %v1061 = vmul.f32 %v964, 1.442695
      %v1062 = vpow.pop %v1061
      %v1063 = vmul.f32 %v965, 1.442695
      %v1064 = vpow.pop %v1063
      %v1065 = vmul.f32 %v966, 1.442695
      %v1066 = vpow.pop %v1065
      %v1067 = vmul.f32 %v967, 1.442695
      %v1068 = vpow.pop %v1067
      %v1069 = vmul.f32 %v968, 1.442695
      %v1070 = vpow.pop %v1069
      %v1071 = vmul.f32 %v969, 1.442695
      %v1072 = vpow.pop %v1071
      %v1073 = vmul.f32 %v970, 1.442695
      %v1074 = vpow.pop %v1073
      %v1075 = vmul.f32 %v971, 1.442695
      %v1076 = vpow.pop %v1075
      %v1077 = vmul.f32 %v972, 1.442695
      %v1078 = vpow.pop %v1077
      %v1079 = vmul.f32 %v973, 1.442695
      %v1080 = vpow.pop %v1079
      %v1081 = vmul.f32 %v974, 1.442695
      %v1082 = vpow.pop %v1081
      %v1083 = vmul.f32 %v975, 1.442695
      %v1084 = vpow.pop %v1083
      %v1085 = vmul.f32 %v976, 1.442695
      %v1086 = vpow.pop %v1085
      %v1087 = vmul.f32 %v977, 1.442695
      %v1088 = vpow.pop %v1087
      %v1089 = vmul.f32 %v978, 1.442695
      %v1090 = vpow.pop %v1089
      %v1091 = vmul.f32 %v979, 1.442695
      %v1092 = vpow.pop %v1091
      %v1093 = vmul.f32 %v980, 1.442695
      %v1094 = vpow.pop %v1093
      %v1095 = vmul.f32 %v981, 1.442695
      %v1096 = vpow.pop %v1095
      %v1097 = vmul.f32 %v982, 1.442695
      %v1098 = vpow.pop %v1097
      %v1099 = vmul.f32 %v983, 1.442695
      %v1100 = vpow.pop %v1099
      %v1101 = vmul.f32 %v984, 1.442695
      %v1102 = vpow.pop %v1101
      %v1103 = vmul.f32 %v985, 1.442695
      %v1104 = vpow.pop %v1103
      %v1105 = vmul.f32 %v986, 1.442695
      %v1106 = vpow.pop %v1105
      %v1107 = vmul.f32 %v987, 1.442695
      %v1108 = vpow.pop %v1107
      %v1109 = vmul.f32 %v988, 1.442695
      %v1110 = vpow.pop %v1109
      %v1111 = vmul.f32 %v989, 1.442695
      %v1112 = vpow.pop %v1111
      %v1113 = vmul.f32 %v990, 1.442695
      %v1114 = vpow.pop %v1113
      %v1115 = vmul.f32 %v991, 1.442695
      %v1116 = vpow.pop %v1115
      %v1117 = vmul.f32 %v992, 1.442695
      %v1118 = vpow.pop %v1117
      %v1119 = vmul.f32 %v993, 1.442695
      %v1120 = vpow.pop %v1119
      %v1121 = vmul.f32 %v994, 1.442695
      %v1122 = vpow.pop %v1121
      %v1123 = vadd.f32 %v996, 1.0
      %v1124 = vadd.f32 %v998, 1.0
      %v1125 = vadd.f32 %v1000, 1.0
      %v1126 = vadd.f32 %v1002, 1.0
      %v1127 = vadd.f32 %v1004, 1.0
      %v1128 = vadd.f32 %v1006, 1.0
      %v1129 = vadd.f32 %v1008, 1.0
      %v1130 = vadd.f32 %v1010, 1.0
      %v1131 = vadd.f32 %v1012, 1.0
      %v1132 = vadd.f32 %v1014, 1.0
      %v1133 = vadd.f32 %v1016, 1.0
      %v1134 = vadd.f32 %v1018, 1.0
      %v1135 = vadd.f32 %v1020, 1.0
      %v1136 = vadd.f32 %v1022, 1.0
      %v1137 = vadd.f32 %v1024, 1.0
      %v1138 = vadd.f32 %v1026, 1.0
      %v1139 = vadd.f32 %v1028, 1.0
      %v1140 = vadd.f32 %v1030, 1.0
      %v1141 = vadd.f32 %v1032, 1.0
      %v1142 = vadd.f32 %v1034, 1.0
      %v1143 = vadd.f32 %v1036, 1.0
      %v1144 = vadd.f32 %v1038, 1.0
      %v1145 = vadd.f32 %v1040, 1.0
      %v1146 = vadd.f32 %v1042, 1.0
      %v1147 = vadd.f32 %v1044, 1.0
      %v1148 = vadd.f32 %v1046, 1.0
      %v1149 = vadd.f32 %v1048, 1.0
      %v1150 = vadd.f32 %v1050, 1.0
      %v1151 = vadd.f32 %v1052, 1.0
      %v1152 = vadd.f32 %v1054, 1.0
      %v1153 = vadd.f32 %v1056, 1.0
      %v1154 = vadd.f32 %v1058, 1.0
      %v1155 = vadd.f32 %v1060, 1.0
      %v1156 = vadd.f32 %v1062, 1.0
      %v1157 = vadd.f32 %v1064, 1.0
      %v1158 = vadd.f32 %v1066, 1.0
      %v1159 = vadd.f32 %v1068, 1.0
      %v1160 = vadd.f32 %v1070, 1.0
      %v1161 = vadd.f32 %v1072, 1.0
      %v1162 = vadd.f32 %v1074, 1.0
      %v1163 = vadd.f32 %v1076, 1.0
      %v1164 = vadd.f32 %v1078, 1.0
      %v1165 = vadd.f32 %v1080, 1.0
      %v1166 = vadd.f32 %v1082, 1.0
      %v1167 = vadd.f32 %v1084, 1.0
      %v1168 = vadd.f32 %v1086, 1.0
      %v1169 = vadd.f32 %v1088, 1.0
      %v1170 = vadd.f32 %v1090, 1.0
      %v1171 = vadd.f32 %v1092, 1.0
      %v1172 = vadd.f32 %v1094, 1.0
      %v1173 = vadd.f32 %v1096, 1.0
      %v1174 = vadd.f32 %v1098, 1.0
      %v1175 = vadd.f32 %v1100, 1.0
      %v1176 = vadd.f32 %v1102, 1.0
      %v1177 = vadd.f32 %v1104, 1.0
      %v1178 = vadd.f32 %v1106, 1.0
      %v1179 = vadd.f32 %v1108, 1.0
      %v1180 = vadd.f32 %v1110, 1.0
      %v1181 = vadd.f32 %v1112, 1.0
      %v1182 = vadd.f32 %v1114, 1.0
      %v1183 = vadd.f32 %v1116, 1.0
      %v1184 = vadd.f32 %v1118, 1.0
      %v1185 = vadd.f32 %v1120, 1.0
      %v1186 = vadd.f32 %v1122, 1.0
      %v1187 = vrcp.pop %v1123
      %v1188 = vmul.f32 %v1123, %v1187
      %v1189 = vsub.f32 1.0, %v1188
      %v1190 = vmul.f32 %v1187, %v1189
      %v1191 = vadd.f32 %v1187, %v1190
      %vm1192 = vweird.f32 %v1123
      %vm1193 = vweird.f32 %v1187
      %vm1194 = vmor %vm1192, %vm1193
      %v1195 = vsel %vm1194, %v1187, %v1191
      %v1196 = vand.u32 2147483647, %v1123
      %vm1197 = vcmp.eq.f32.partialorder %v1196, 8.507059e+37
      %v1198 = vand.u32 %v1123, 2147483648
      %v1199 = vor.u32 1.1754944e-38, %v1198
      %v1200 = vsel %vm1197, %v1199, %v1195
      %v1201 = vmul.f32 1.0, %v1200
      %v1202 = vrcp.pop %v1124
      %v1203 = vmul.f32 %v1124, %v1202
      %v1204 = vsub.f32 1.0, %v1203
      %v1205 = vmul.f32 %v1202, %v1204
      %v1206 = vadd.f32 %v1202, %v1205
      %vm1207 = vweird.f32 %v1124
      %vm1208 = vweird.f32 %v1202
      %vm1209 = vmor %vm1207, %vm1208
      %v1210 = vsel %vm1209, %v1202, %v1206
      %v1211 = vand.u32 2147483647, %v1124
      %vm1212 = vcmp.eq.f32.partialorder %v1211, 8.507059e+37
      %v1213 = vand.u32 %v1124, 2147483648
      %v1214 = vor.u32 1.1754944e-38, %v1213
      %v1215 = vsel %vm1212, %v1214, %v1210
      %v1216 = vmul.f32 1.0, %v1215
      %v1217 = vrcp.pop %v1125
      %v1218 = vmul.f32 %v1125, %v1217
      %v1219 = vsub.f32 1.0, %v1218
      %v1220 = vmul.f32 %v1217, %v1219
      %v1221 = vadd.f32 %v1217, %v1220
      %vm1222 = vweird.f32 %v1125
      %vm1223 = vweird.f32 %v1217
      %vm1224 = vmor %vm1222, %vm1223
      %v1225 = vsel %vm1224, %v1217, %v1221
      %v1226 = vand.u32 2147483647, %v1125
      %vm1227 = vcmp.eq.f32.partialorder %v1226, 8.507059e+37
      %v1228 = vand.u32 %v1125, 2147483648
      %v1229 = vor.u32 1.1754944e-38, %v1228
      %v1230 = vsel %vm1227, %v1229, %v1225
      %v1231 = vmul.f32 1.0, %v1230
      %v1232 = vrcp.pop %v1126
      %v1233 = vmul.f32 %v1126, %v1232
      %v1234 = vsub.f32 1.0, %v1233
      %v1235 = vmul.f32 %v1232, %v1234
      %v1236 = vadd.f32 %v1232, %v1235
      %vm1237 = vweird.f32 %v1126
      %vm1238 = vweird.f32 %v1232
      %vm1239 = vmor %vm1237, %vm1238
      %v1240 = vsel %vm1239, %v1232, %v1236
      %v1241 = vand.u32 2147483647, %v1126
      %vm1242 = vcmp.eq.f32.partialorder %v1241, 8.507059e+37
      %v1243 = vand.u32 %v1126, 2147483648
      %v1244 = vor.u32 1.1754944e-38, %v1243
      %v1245 = vsel %vm1242, %v1244, %v1240
      %v1246 = vmul.f32 1.0, %v1245
      %v1247 = vrcp.pop %v1127
      %v1248 = vmul.f32 %v1127, %v1247
      %v1249 = vsub.f32 1.0, %v1248
      %v1250 = vmul.f32 %v1247, %v1249
      %v1251 = vadd.f32 %v1247, %v1250
      %vm1252 = vweird.f32 %v1127
      %vm1253 = vweird.f32 %v1247
      %vm1254 = vmor %vm1252, %vm1253
      %v1255 = vsel %vm1254, %v1247, %v1251
      %v1256 = vand.u32 2147483647, %v1127
      %vm1257 = vcmp.eq.f32.partialorder %v1256, 8.507059e+37
      %v1258 = vand.u32 %v1127, 2147483648
      %v1259 = vor.u32 1.1754944e-38, %v1258
      %v1260 = vsel %vm1257, %v1259, %v1255
      %v1261 = vmul.f32 1.0, %v1260
      %v1262 = vrcp.pop %v1128
      %v1263 = vmul.f32 %v1128, %v1262
      %v1264 = vsub.f32 1.0, %v1263
      %v1265 = vmul.f32 %v1262, %v1264
      %v1266 = vadd.f32 %v1262, %v1265
      %vm1267 = vweird.f32 %v1128
      %vm1268 = vweird.f32 %v1262
      %vm1269 = vmor %vm1267, %vm1268
      %v1270 = vsel %vm1269, %v1262, %v1266
      %v1271 = vand.u32 2147483647, %v1128
      %vm1272 = vcmp.eq.f32.partialorder %v1271, 8.507059e+37
      %v1273 = vand.u32 %v1128, 2147483648
      %v1274 = vor.u32 1.1754944e-38, %v1273
      %v1275 = vsel %vm1272, %v1274, %v1270
      %v1276 = vmul.f32 1.0, %v1275
      %v1277 = vrcp.pop %v1129
      %v1278 = vmul.f32 %v1129, %v1277
      %v1279 = vsub.f32 1.0, %v1278
      %v1280 = vmul.f32 %v1277, %v1279
      %v1281 = vadd.f32 %v1277, %v1280
      %vm1282 = vweird.f32 %v1129
      %vm1283 = vweird.f32 %v1277
      %vm1284 = vmor %vm1282, %vm1283
      %v1285 = vsel %vm1284, %v1277, %v1281
      %v1286 = vand.u32 2147483647, %v1129
      %vm1287 = vcmp.eq.f32.partialorder %v1286, 8.507059e+37
      %v1288 = vand.u32 %v1129, 2147483648
      %v1289 = vor.u32 1.1754944e-38, %v1288
      %v1290 = vsel %vm1287, %v1289, %v1285
      %v1291 = vmul.f32 1.0, %v1290
      %v1292 = vrcp.pop %v1130
      %v1293 = vmul.f32 %v1130, %v1292
      %v1294 = vsub.f32 1.0, %v1293
      %v1295 = vmul.f32 %v1292, %v1294
      %v1296 = vadd.f32 %v1292, %v1295
      %vm1297 = vweird.f32 %v1130
      %vm1298 = vweird.f32 %v1292
      %vm1299 = vmor %vm1297, %vm1298
      %v1300 = vsel %vm1299, %v1292, %v1296
      %v1301 = vand.u32 2147483647, %v1130
      %vm1302 = vcmp.eq.f32.partialorder %v1301, 8.507059e+37
      %v1303 = vand.u32 %v1130, 2147483648
      %v1304 = vor.u32 1.1754944e-38, %v1303
      %v1305 = vsel %vm1302, %v1304, %v1300
      %v1306 = vmul.f32 1.0, %v1305
      %v1307 = vrcp.pop %v1131
      %v1308 = vmul.f32 %v1131, %v1307
      %v1309 = vsub.f32 1.0, %v1308
      %v1310 = vmul.f32 %v1307, %v1309
      %v1311 = vadd.f32 %v1307, %v1310
      %vm1312 = vweird.f32 %v1131
      %vm1313 = vweird.f32 %v1307
      %vm1314 = vmor %vm1312, %vm1313
      %v1315 = vsel %vm1314, %v1307, %v1311
      %v1316 = vand.u32 2147483647, %v1131
      %vm1317 = vcmp.eq.f32.partialorder %v1316, 8.507059e+37
      %v1318 = vand.u32 %v1131, 2147483648
      %v1319 = vor.u32 1.1754944e-38, %v1318
      %v1320 = vsel %vm1317, %v1319, %v1315
      %v1321 = vmul.f32 1.0, %v1320
      %v1322 = vrcp.pop %v1132
      %v1323 = vmul.f32 %v1132, %v1322
      %v1324 = vsub.f32 1.0, %v1323
      %v1325 = vmul.f32 %v1322, %v1324
      %v1326 = vadd.f32 %v1322, %v1325
      %vm1327 = vweird.f32 %v1132
      %vm1328 = vweird.f32 %v1322
      %vm1329 = vmor %vm1327, %vm1328
      %v1330 = vsel %vm1329, %v1322, %v1326
      %v1331 = vand.u32 2147483647, %v1132
      %vm1332 = vcmp.eq.f32.partialorder %v1331, 8.507059e+37
      %v1333 = vand.u32 %v1132, 2147483648
      %v1334 = vor.u32 1.1754944e-38, %v1333
      %v1335 = vsel %vm1332, %v1334, %v1330
      %v1336 = vmul.f32 1.0, %v1335
      %v1337 = vrcp.pop %v1133
      %v1338 = vmul.f32 %v1133, %v1337
      %v1339 = vsub.f32 1.0, %v1338
      %v1340 = vmul.f32 %v1337, %v1339
      %v1341 = vadd.f32 %v1337, %v1340
      %vm1342 = vweird.f32 %v1133
      %vm1343 = vweird.f32 %v1337
      %vm1344 = vmor %vm1342, %vm1343
      %v1345 = vsel %vm1344, %v1337, %v1341
      %v1346 = vand.u32 2147483647, %v1133
      %vm1347 = vcmp.eq.f32.partialorder %v1346, 8.507059e+37
      %v1348 = vand.u32 %v1133, 2147483648
      %v1349 = vor.u32 1.1754944e-38, %v1348
      %v1350 = vsel %vm1347, %v1349, %v1345
      %v1351 = vmul.f32 1.0, %v1350
      %v1352 = vrcp.pop %v1134
      %v1353 = vmul.f32 %v1134, %v1352
      %v1354 = vsub.f32 1.0, %v1353
      %v1355 = vmul.f32 %v1352, %v1354
      %v1356 = vadd.f32 %v1352, %v1355
      %vm1357 = vweird.f32 %v1134
      %vm1358 = vweird.f32 %v1352
      %vm1359 = vmor %vm1357, %vm1358
      %v1360 = vsel %vm1359, %v1352, %v1356
      %v1361 = vand.u32 2147483647, %v1134
      %vm1362 = vcmp.eq.f32.partialorder %v1361, 8.507059e+37
      %v1363 = vand.u32 %v1134, 2147483648
      %v1364 = vor.u32 1.1754944e-38, %v1363
      %v1365 = vsel %vm1362, %v1364, %v1360
      %v1366 = vmul.f32 1.0, %v1365
      %v1367 = vrcp.pop %v1135
      %v1368 = vmul.f32 %v1135, %v1367
      %v1369 = vsub.f32 1.0, %v1368
      %v1370 = vmul.f32 %v1367, %v1369
      %v1371 = vadd.f32 %v1367, %v1370
      %vm1372 = vweird.f32 %v1135
      %vm1373 = vweird.f32 %v1367
      %vm1374 = vmor %vm1372, %vm1373
      %v1375 = vsel %vm1374, %v1367, %v1371
      %v1376 = vand.u32 2147483647, %v1135
      %vm1377 = vcmp.eq.f32.partialorder %v1376, 8.507059e+37
      %v1378 = vand.u32 %v1135, 2147483648
      %v1379 = vor.u32 1.1754944e-38, %v1378
      %v1380 = vsel %vm1377, %v1379, %v1375
      %v1381 = vmul.f32 1.0, %v1380
      %v1382 = vrcp.pop %v1136
      %v1383 = vmul.f32 %v1136, %v1382
      %v1384 = vsub.f32 1.0, %v1383
      %v1385 = vmul.f32 %v1382, %v1384
      %v1386 = vadd.f32 %v1382, %v1385
      %vm1387 = vweird.f32 %v1136
      %vm1388 = vweird.f32 %v1382
      %vm1389 = vmor %vm1387, %vm1388
      %v1390 = vsel %vm1389, %v1382, %v1386
      %v1391 = vand.u32 2147483647, %v1136
      %vm1392 = vcmp.eq.f32.partialorder %v1391, 8.507059e+37
      %v1393 = vand.u32 %v1136, 2147483648
      %v1394 = vor.u32 1.1754944e-38, %v1393
      %v1395 = vsel %vm1392, %v1394, %v1390
      %v1396 = vmul.f32 1.0, %v1395
      %v1397 = vrcp.pop %v1137
      %v1398 = vmul.f32 %v1137, %v1397
      %v1399 = vsub.f32 1.0, %v1398
      %v1400 = vmul.f32 %v1397, %v1399
      %v1401 = vadd.f32 %v1397, %v1400
      %vm1402 = vweird.f32 %v1137
      %vm1403 = vweird.f32 %v1397
      %vm1404 = vmor %vm1402, %vm1403
      %v1405 = vsel %vm1404, %v1397, %v1401
      %v1406 = vand.u32 2147483647, %v1137
      %vm1407 = vcmp.eq.f32.partialorder %v1406, 8.507059e+37
      %v1408 = vand.u32 %v1137, 2147483648
      %v1409 = vor.u32 1.1754944e-38, %v1408
      %v1410 = vsel %vm1407, %v1409, %v1405
      %v1411 = vmul.f32 1.0, %v1410
      %v1412 = vrcp.pop %v1138
      %v1413 = vmul.f32 %v1138, %v1412
      %v1414 = vsub.f32 1.0, %v1413
      %v1415 = vmul.f32 %v1412, %v1414
      %v1416 = vadd.f32 %v1412, %v1415
      %vm1417 = vweird.f32 %v1138
      %vm1418 = vweird.f32 %v1412
      %vm1419 = vmor %vm1417, %vm1418
      %v1420 = vsel %vm1419, %v1412, %v1416
      %v1421 = vand.u32 2147483647, %v1138
      %vm1422 = vcmp.eq.f32.partialorder %v1421, 8.507059e+37
      %v1423 = vand.u32 %v1138, 2147483648
      %v1424 = vor.u32 1.1754944e-38, %v1423
      %v1425 = vsel %vm1422, %v1424, %v1420
      %v1426 = vmul.f32 1.0, %v1425
      %v1427 = vrcp.pop %v1139
      %v1428 = vmul.f32 %v1139, %v1427
      %v1429 = vsub.f32 1.0, %v1428
      %v1430 = vmul.f32 %v1427, %v1429
      %v1431 = vadd.f32 %v1427, %v1430
      %vm1432 = vweird.f32 %v1139
      %vm1433 = vweird.f32 %v1427
      %vm1434 = vmor %vm1432, %vm1433
      %v1435 = vsel %vm1434, %v1427, %v1431
      %v1436 = vand.u32 2147483647, %v1139
      %vm1437 = vcmp.eq.f32.partialorder %v1436, 8.507059e+37
      %v1438 = vand.u32 %v1139, 2147483648
      %v1439 = vor.u32 1.1754944e-38, %v1438
      %v1440 = vsel %vm1437, %v1439, %v1435
      %v1441 = vmul.f32 1.0, %v1440
      %v1442 = vrcp.pop %v1140
      %v1443 = vmul.f32 %v1140, %v1442
      %v1444 = vsub.f32 1.0, %v1443
      %v1445 = vmul.f32 %v1442, %v1444
      %v1446 = vadd.f32 %v1442, %v1445
      %vm1447 = vweird.f32 %v1140
      %vm1448 = vweird.f32 %v1442
      %vm1449 = vmor %vm1447, %vm1448
      %v1450 = vsel %vm1449, %v1442, %v1446
      %v1451 = vand.u32 2147483647, %v1140
      %vm1452 = vcmp.eq.f32.partialorder %v1451, 8.507059e+37
      %v1453 = vand.u32 %v1140, 2147483648
      %v1454 = vor.u32 1.1754944e-38, %v1453
      %v1455 = vsel %vm1452, %v1454, %v1450
      %v1456 = vmul.f32 1.0, %v1455
      %v1457 = vrcp.pop %v1141
      %v1458 = vmul.f32 %v1141, %v1457
      %v1459 = vsub.f32 1.0, %v1458
      %v1460 = vmul.f32 %v1457, %v1459
      %v1461 = vadd.f32 %v1457, %v1460
      %vm1462 = vweird.f32 %v1141
      %vm1463 = vweird.f32 %v1457
      %vm1464 = vmor %vm1462, %vm1463
      %v1465 = vsel %vm1464, %v1457, %v1461
      %v1466 = vand.u32 2147483647, %v1141
      %vm1467 = vcmp.eq.f32.partialorder %v1466, 8.507059e+37
      %v1468 = vand.u32 %v1141, 2147483648
      %v1469 = vor.u32 1.1754944e-38, %v1468
      %v1470 = vsel %vm1467, %v1469, %v1465
      %v1471 = vmul.f32 1.0, %v1470
      %v1472 = vrcp.pop %v1142
      %v1473 = vmul.f32 %v1142, %v1472
      %v1474 = vsub.f32 1.0, %v1473
      %v1475 = vmul.f32 %v1472, %v1474
      %v1476 = vadd.f32 %v1472, %v1475
      %vm1477 = vweird.f32 %v1142
      %vm1478 = vweird.f32 %v1472
      %vm1479 = vmor %vm1477, %vm1478
      %v1480 = vsel %vm1479, %v1472, %v1476
      %v1481 = vand.u32 2147483647, %v1142
      %vm1482 = vcmp.eq.f32.partialorder %v1481, 8.507059e+37
      %v1483 = vand.u32 %v1142, 2147483648
      %v1484 = vor.u32 1.1754944e-38, %v1483
      %v1485 = vsel %vm1482, %v1484, %v1480
      %v1486 = vmul.f32 1.0, %v1485
      %v1487 = vrcp.pop %v1143
      %v1488 = vmul.f32 %v1143, %v1487
      %v1489 = vsub.f32 1.0, %v1488
      %v1490 = vmul.f32 %v1487, %v1489
      %v1491 = vadd.f32 %v1487, %v1490
      %vm1492 = vweird.f32 %v1143
      %vm1493 = vweird.f32 %v1487
      %vm1494 = vmor %vm1492, %vm1493
      %v1495 = vsel %vm1494, %v1487, %v1491
      %v1496 = vand.u32 2147483647, %v1143
      %vm1497 = vcmp.eq.f32.partialorder %v1496, 8.507059e+37
      %v1498 = vand.u32 %v1143, 2147483648
      %v1499 = vor.u32 1.1754944e-38, %v1498
      %v1500 = vsel %vm1497, %v1499, %v1495
      %v1501 = vmul.f32 1.0, %v1500
      %v1502 = vrcp.pop %v1144
      %v1503 = vmul.f32 %v1144, %v1502
      %v1504 = vsub.f32 1.0, %v1503
      %v1505 = vmul.f32 %v1502, %v1504
      %v1506 = vadd.f32 %v1502, %v1505
      %vm1507 = vweird.f32 %v1144
      %vm1508 = vweird.f32 %v1502
      %vm1509 = vmor %vm1507, %vm1508
      %v1510 = vsel %vm1509, %v1502, %v1506
      %v1511 = vand.u32 2147483647, %v1144
      %vm1512 = vcmp.eq.f32.partialorder %v1511, 8.507059e+37
      %v1513 = vand.u32 %v1144, 2147483648
      %v1514 = vor.u32 1.1754944e-38, %v1513
      %v1515 = vsel %vm1512, %v1514, %v1510
      %v1516 = vmul.f32 1.0, %v1515
      %v1517 = vrcp.pop %v1145
      %v1518 = vmul.f32 %v1145, %v1517
      %v1519 = vsub.f32 1.0, %v1518
      %v1520 = vmul.f32 %v1517, %v1519
      %v1521 = vadd.f32 %v1517, %v1520
      %vm1522 = vweird.f32 %v1145
      %vm1523 = vweird.f32 %v1517
      %vm1524 = vmor %vm1522, %vm1523
      %v1525 = vsel %vm1524, %v1517, %v1521
      %v1526 = vand.u32 2147483647, %v1145
      %vm1527 = vcmp.eq.f32.partialorder %v1526, 8.507059e+37
      %v1528 = vand.u32 %v1145, 2147483648
      %v1529 = vor.u32 1.1754944e-38, %v1528
      %v1530 = vsel %vm1527, %v1529, %v1525
      %v1531 = vmul.f32 1.0, %v1530
      %v1532 = vrcp.pop %v1146
      %v1533 = vmul.f32 %v1146, %v1532
      %v1534 = vsub.f32 1.0, %v1533
      %v1535 = vmul.f32 %v1532, %v1534
      %v1536 = vadd.f32 %v1532, %v1535
      %vm1537 = vweird.f32 %v1146
      %vm1538 = vweird.f32 %v1532
      %vm1539 = vmor %vm1537, %vm1538
      %v1540 = vsel %vm1539, %v1532, %v1536
      %v1541 = vand.u32 2147483647, %v1146
      %vm1542 = vcmp.eq.f32.partialorder %v1541, 8.507059e+37
      %v1543 = vand.u32 %v1146, 2147483648
      %v1544 = vor.u32 1.1754944e-38, %v1543
      %v1545 = vsel %vm1542, %v1544, %v1540
      %v1546 = vmul.f32 1.0, %v1545
      %v1547 = vrcp.pop %v1147
      %v1548 = vmul.f32 %v1147, %v1547
      %v1549 = vsub.f32 1.0, %v1548
      %v1550 = vmul.f32 %v1547, %v1549
      %v1551 = vadd.f32 %v1547, %v1550
      %vm1552 = vweird.f32 %v1147
      %vm1553 = vweird.f32 %v1547
      %vm1554 = vmor %vm1552, %vm1553
      %v1555 = vsel %vm1554, %v1547, %v1551
      %v1556 = vand.u32 2147483647, %v1147
      %vm1557 = vcmp.eq.f32.partialorder %v1556, 8.507059e+37
      %v1558 = vand.u32 %v1147, 2147483648
      %v1559 = vor.u32 1.1754944e-38, %v1558
      %v1560 = vsel %vm1557, %v1559, %v1555
      %v1561 = vmul.f32 1.0, %v1560
      %v1562 = vrcp.pop %v1148
      %v1563 = vmul.f32 %v1148, %v1562
      %v1564 = vsub.f32 1.0, %v1563
      %v1565 = vmul.f32 %v1562, %v1564
      %v1566 = vadd.f32 %v1562, %v1565
      %vm1567 = vweird.f32 %v1148
      %vm1568 = vweird.f32 %v1562
      %vm1569 = vmor %vm1567, %vm1568
      %v1570 = vsel %vm1569, %v1562, %v1566
      %v1571 = vand.u32 2147483647, %v1148
      %vm1572 = vcmp.eq.f32.partialorder %v1571, 8.507059e+37
      %v1573 = vand.u32 %v1148, 2147483648
      %v1574 = vor.u32 1.1754944e-38, %v1573
      %v1575 = vsel %vm1572, %v1574, %v1570
      %v1576 = vmul.f32 1.0, %v1575
      %v1577 = vrcp.pop %v1149
      %v1578 = vmul.f32 %v1149, %v1577
      %v1579 = vsub.f32 1.0, %v1578
      %v1580 = vmul.f32 %v1577, %v1579
      %v1581 = vadd.f32 %v1577, %v1580
      %vm1582 = vweird.f32 %v1149
      %vm1583 = vweird.f32 %v1577
      %vm1584 = vmor %vm1582, %vm1583
      %v1585 = vsel %vm1584, %v1577, %v1581
      %v1586 = vand.u32 2147483647, %v1149
      %vm1587 = vcmp.eq.f32.partialorder %v1586, 8.507059e+37
      %v1588 = vand.u32 %v1149, 2147483648
      %v1589 = vor.u32 1.1754944e-38, %v1588
      %v1590 = vsel %vm1587, %v1589, %v1585
      %v1591 = vmul.f32 1.0, %v1590
      %v1592 = vrcp.pop %v1150
      %v1593 = vmul.f32 %v1150, %v1592
      %v1594 = vsub.f32 1.0, %v1593
      %v1595 = vmul.f32 %v1592, %v1594
      %v1596 = vadd.f32 %v1592, %v1595
      %vm1597 = vweird.f32 %v1150
      %vm1598 = vweird.f32 %v1592
      %vm1599 = vmor %vm1597, %vm1598
      %v1600 = vsel %vm1599, %v1592, %v1596
      %v1601 = vand.u32 2147483647, %v1150
      %vm1602 = vcmp.eq.f32.partialorder %v1601, 8.507059e+37
      %v1603 = vand.u32 %v1150, 2147483648
      %v1604 = vor.u32 1.1754944e-38, %v1603
      %v1605 = vsel %vm1602, %v1604, %v1600
      %v1606 = vmul.f32 1.0, %v1605
      %v1607 = vrcp.pop %v1151
      %v1608 = vmul.f32 %v1151, %v1607
      %v1609 = vsub.f32 1.0, %v1608
      %v1610 = vmul.f32 %v1607, %v1609
      %v1611 = vadd.f32 %v1607, %v1610
      %vm1612 = vweird.f32 %v1151
      %vm1613 = vweird.f32 %v1607
      %vm1614 = vmor %vm1612, %vm1613
      %v1615 = vsel %vm1614, %v1607, %v1611
      %v1616 = vand.u32 2147483647, %v1151
      %vm1617 = vcmp.eq.f32.partialorder %v1616, 8.507059e+37
      %v1618 = vand.u32 %v1151, 2147483648
      %v1619 = vor.u32 1.1754944e-38, %v1618
      %v1620 = vsel %vm1617, %v1619, %v1615
      %v1621 = vmul.f32 1.0, %v1620
      %v1622 = vrcp.pop %v1152
      %v1623 = vmul.f32 %v1152, %v1622
      %v1624 = vsub.f32 1.0, %v1623
      %v1625 = vmul.f32 %v1622, %v1624
      %v1626 = vadd.f32 %v1622, %v1625
      %vm1627 = vweird.f32 %v1152
      %vm1628 = vweird.f32 %v1622
      %vm1629 = vmor %vm1627, %vm1628
      %v1630 = vsel %vm1629, %v1622, %v1626
      %v1631 = vand.u32 2147483647, %v1152
      %vm1632 = vcmp.eq.f32.partialorder %v1631, 8.507059e+37
      %v1633 = vand.u32 %v1152, 2147483648
      %v1634 = vor.u32 1.1754944e-38, %v1633
      %v1635 = vsel %vm1632, %v1634, %v1630
      %v1636 = vmul.f32 1.0, %v1635
      %v1637 = vrcp.pop %v1153
      %v1638 = vmul.f32 %v1153, %v1637
      %v1639 = vsub.f32 1.0, %v1638
      %v1640 = vmul.f32 %v1637, %v1639
      %v1641 = vadd.f32 %v1637, %v1640
      %vm1642 = vweird.f32 %v1153
      %vm1643 = vweird.f32 %v1637
      %vm1644 = vmor %vm1642, %vm1643
      %v1645 = vsel %vm1644, %v1637, %v1641
      %v1646 = vand.u32 2147483647, %v1153
      %vm1647 = vcmp.eq.f32.partialorder %v1646, 8.507059e+37
      %v1648 = vand.u32 %v1153, 2147483648
      %v1649 = vor.u32 1.1754944e-38, %v1648
      %v1650 = vsel %vm1647, %v1649, %v1645
      %v1651 = vmul.f32 1.0, %v1650
      %v1652 = vrcp.pop %v1154
      %v1653 = vmul.f32 %v1154, %v1652
      %v1654 = vsub.f32 1.0, %v1653
      %v1655 = vmul.f32 %v1652, %v1654
      %v1656 = vadd.f32 %v1652, %v1655
      %vm1657 = vweird.f32 %v1154
      %vm1658 = vweird.f32 %v1652
      %vm1659 = vmor %vm1657, %vm1658
      %v1660 = vsel %vm1659, %v1652, %v1656
      %v1661 = vand.u32 2147483647, %v1154
      %vm1662 = vcmp.eq.f32.partialorder %v1661, 8.507059e+37
      %v1663 = vand.u32 %v1154, 2147483648
      %v1664 = vor.u32 1.1754944e-38, %v1663
      %v1665 = vsel %vm1662, %v1664, %v1660
      %v1666 = vmul.f32 1.0, %v1665
      %v1667 = vrcp.pop %v1155
      %v1668 = vmul.f32 %v1155, %v1667
      %v1669 = vsub.f32 1.0, %v1668
      %v1670 = vmul.f32 %v1667, %v1669
      %v1671 = vadd.f32 %v1667, %v1670
      %vm1672 = vweird.f32 %v1155
      %vm1673 = vweird.f32 %v1667
      %vm1674 = vmor %vm1672, %vm1673
      %v1675 = vsel %vm1674, %v1667, %v1671
      %v1676 = vand.u32 2147483647, %v1155
      %vm1677 = vcmp.eq.f32.partialorder %v1676, 8.507059e+37
      %v1678 = vand.u32 %v1155, 2147483648
      %v1679 = vor.u32 1.1754944e-38, %v1678
      %v1680 = vsel %vm1677, %v1679, %v1675
      %v1681 = vmul.f32 1.0, %v1680
      %v1682 = vrcp.pop %v1156
      %v1683 = vmul.f32 %v1156, %v1682
      %v1684 = vsub.f32 1.0, %v1683
      %v1685 = vmul.f32 %v1682, %v1684
      %v1686 = vadd.f32 %v1682, %v1685
      %vm1687 = vweird.f32 %v1156
      %vm1688 = vweird.f32 %v1682
      %vm1689 = vmor %vm1687, %vm1688
      %v1690 = vsel %vm1689, %v1682, %v1686
      %v1691 = vand.u32 2147483647, %v1156
      %vm1692 = vcmp.eq.f32.partialorder %v1691, 8.507059e+37
      %v1693 = vand.u32 %v1156, 2147483648
      %v1694 = vor.u32 1.1754944e-38, %v1693
      %v1695 = vsel %vm1692, %v1694, %v1690
      %v1696 = vmul.f32 1.0, %v1695
      %v1697 = vrcp.pop %v1157
      %v1698 = vmul.f32 %v1157, %v1697
      %v1699 = vsub.f32 1.0, %v1698
      %v1700 = vmul.f32 %v1697, %v1699
      %v1701 = vadd.f32 %v1697, %v1700
      %vm1702 = vweird.f32 %v1157
      %vm1703 = vweird.f32 %v1697
      %vm1704 = vmor %vm1702, %vm1703
      %v1705 = vsel %vm1704, %v1697, %v1701
      %v1706 = vand.u32 2147483647, %v1157
      %vm1707 = vcmp.eq.f32.partialorder %v1706, 8.507059e+37
      %v1708 = vand.u32 %v1157, 2147483648
      %v1709 = vor.u32 1.1754944e-38, %v1708
      %v1710 = vsel %vm1707, %v1709, %v1705
      %v1711 = vmul.f32 1.0, %v1710
      %v1712 = vrcp.pop %v1158
      %v1713 = vmul.f32 %v1158, %v1712
      %v1714 = vsub.f32 1.0, %v1713
      %v1715 = vmul.f32 %v1712, %v1714
      %v1716 = vadd.f32 %v1712, %v1715
      %vm1717 = vweird.f32 %v1158
      %vm1718 = vweird.f32 %v1712
      %vm1719 = vmor %vm1717, %vm1718
      %v1720 = vsel %vm1719, %v1712, %v1716
      %v1721 = vand.u32 2147483647, %v1158
      %vm1722 = vcmp.eq.f32.partialorder %v1721, 8.507059e+37
      %v1723 = vand.u32 %v1158, 2147483648
      %v1724 = vor.u32 1.1754944e-38, %v1723
      %v1725 = vsel %vm1722, %v1724, %v1720
      %v1726 = vmul.f32 1.0, %v1725
      %v1727 = vrcp.pop %v1159
      %v1728 = vmul.f32 %v1159, %v1727
      %v1729 = vsub.f32 1.0, %v1728
      %v1730 = vmul.f32 %v1727, %v1729
      %v1731 = vadd.f32 %v1727, %v1730
      %vm1732 = vweird.f32 %v1159
      %vm1733 = vweird.f32 %v1727
      %vm1734 = vmor %vm1732, %vm1733
      %v1735 = vsel %vm1734, %v1727, %v1731
      %v1736 = vand.u32 2147483647, %v1159
      %vm1737 = vcmp.eq.f32.partialorder %v1736, 8.507059e+37
      %v1738 = vand.u32 %v1159, 2147483648
      %v1739 = vor.u32 1.1754944e-38, %v1738
      %v1740 = vsel %vm1737, %v1739, %v1735
      %v1741 = vmul.f32 1.0, %v1740
      %v1742 = vrcp.pop %v1160
      %v1743 = vmul.f32 %v1160, %v1742
      %v1744 = vsub.f32 1.0, %v1743
      %v1745 = vmul.f32 %v1742, %v1744
      %v1746 = vadd.f32 %v1742, %v1745
      %vm1747 = vweird.f32 %v1160
      %vm1748 = vweird.f32 %v1742
      %vm1749 = vmor %vm1747, %vm1748
      %v1750 = vsel %vm1749, %v1742, %v1746
      %v1751 = vand.u32 2147483647, %v1160
      %vm1752 = vcmp.eq.f32.partialorder %v1751, 8.507059e+37
      %v1753 = vand.u32 %v1160, 2147483648
      %v1754 = vor.u32 1.1754944e-38, %v1753
      %v1755 = vsel %vm1752, %v1754, %v1750
      %v1756 = vmul.f32 1.0, %v1755
      %v1757 = vrcp.pop %v1161
      %v1758 = vmul.f32 %v1161, %v1757
      %v1759 = vsub.f32 1.0, %v1758
      %v1760 = vmul.f32 %v1757, %v1759
      %v1761 = vadd.f32 %v1757, %v1760
      %vm1762 = vweird.f32 %v1161
      %vm1763 = vweird.f32 %v1757
      %vm1764 = vmor %vm1762, %vm1763
      %v1765 = vsel %vm1764, %v1757, %v1761
      %v1766 = vand.u32 2147483647, %v1161
      %vm1767 = vcmp.eq.f32.partialorder %v1766, 8.507059e+37
      %v1768 = vand.u32 %v1161, 2147483648
      %v1769 = vor.u32 1.1754944e-38, %v1768
      %v1770 = vsel %vm1767, %v1769, %v1765
      %v1771 = vmul.f32 1.0, %v1770
      %v1772 = vrcp.pop %v1162
      %v1773 = vmul.f32 %v1162, %v1772
      %v1774 = vsub.f32 1.0, %v1773
      %v1775 = vmul.f32 %v1772, %v1774
      %v1776 = vadd.f32 %v1772, %v1775
      %vm1777 = vweird.f32 %v1162
      %vm1778 = vweird.f32 %v1772
      %vm1779 = vmor %vm1777, %vm1778
      %v1780 = vsel %vm1779, %v1772, %v1776
      %v1781 = vand.u32 2147483647, %v1162
      %vm1782 = vcmp.eq.f32.partialorder %v1781, 8.507059e+37
      %v1783 = vand.u32 %v1162, 2147483648
      %v1784 = vor.u32 1.1754944e-38, %v1783
      %v1785 = vsel %vm1782, %v1784, %v1780
      %v1786 = vmul.f32 1.0, %v1785
      %v1787 = vrcp.pop %v1163
      %v1788 = vmul.f32 %v1163, %v1787
      %v1789 = vsub.f32 1.0, %v1788
      %v1790 = vmul.f32 %v1787, %v1789
      %v1791 = vadd.f32 %v1787, %v1790
      %vm1792 = vweird.f32 %v1163
      %vm1793 = vweird.f32 %v1787
      %vm1794 = vmor %vm1792, %vm1793
      %v1795 = vsel %vm1794, %v1787, %v1791
      %v1796 = vand.u32 2147483647, %v1163
      %vm1797 = vcmp.eq.f32.partialorder %v1796, 8.507059e+37
      %v1798 = vand.u32 %v1163, 2147483648
      %v1799 = vor.u32 1.1754944e-38, %v1798
      %v1800 = vsel %vm1797, %v1799, %v1795
      %v1801 = vmul.f32 1.0, %v1800
      %v1802 = vrcp.pop %v1164
      %v1803 = vmul.f32 %v1164, %v1802
      %v1804 = vsub.f32 1.0, %v1803
      %v1805 = vmul.f32 %v1802, %v1804
      %v1806 = vadd.f32 %v1802, %v1805
      %vm1807 = vweird.f32 %v1164
      %vm1808 = vweird.f32 %v1802
      %vm1809 = vmor %vm1807, %vm1808
      %v1810 = vsel %vm1809, %v1802, %v1806
      %v1811 = vand.u32 2147483647, %v1164
      %vm1812 = vcmp.eq.f32.partialorder %v1811, 8.507059e+37
      %v1813 = vand.u32 %v1164, 2147483648
      %v1814 = vor.u32 1.1754944e-38, %v1813
      %v1815 = vsel %vm1812, %v1814, %v1810
      %v1816 = vmul.f32 1.0, %v1815
      %v1817 = vrcp.pop %v1165
      %v1818 = vmul.f32 %v1165, %v1817
      %v1819 = vsub.f32 1.0, %v1818
      %v1820 = vmul.f32 %v1817, %v1819
      %v1821 = vadd.f32 %v1817, %v1820
      %vm1822 = vweird.f32 %v1165
      %vm1823 = vweird.f32 %v1817
      %vm1824 = vmor %vm1822, %vm1823
      %v1825 = vsel %vm1824, %v1817, %v1821
      %v1826 = vand.u32 2147483647, %v1165
      %vm1827 = vcmp.eq.f32.partialorder %v1826, 8.507059e+37
      %v1828 = vand.u32 %v1165, 2147483648
      %v1829 = vor.u32 1.1754944e-38, %v1828
      %v1830 = vsel %vm1827, %v1829, %v1825
      %v1831 = vmul.f32 1.0, %v1830
      %v1832 = vrcp.pop %v1166
      %v1833 = vmul.f32 %v1166, %v1832
      %v1834 = vsub.f32 1.0, %v1833
      %v1835 = vmul.f32 %v1832, %v1834
      %v1836 = vadd.f32 %v1832, %v1835
      %vm1837 = vweird.f32 %v1166
      %vm1838 = vweird.f32 %v1832
      %vm1839 = vmor %vm1837, %vm1838
      %v1840 = vsel %vm1839, %v1832, %v1836
      %v1841 = vand.u32 2147483647, %v1166
      %vm1842 = vcmp.eq.f32.partialorder %v1841, 8.507059e+37
      %v1843 = vand.u32 %v1166, 2147483648
      %v1844 = vor.u32 1.1754944e-38, %v1843
      %v1845 = vsel %vm1842, %v1844, %v1840
      %v1846 = vmul.f32 1.0, %v1845
      %v1847 = vrcp.pop %v1167
      %v1848 = vmul.f32 %v1167, %v1847
      %v1849 = vsub.f32 1.0, %v1848
      %v1850 = vmul.f32 %v1847, %v1849
      %v1851 = vadd.f32 %v1847, %v1850
      %vm1852 = vweird.f32 %v1167
      %vm1853 = vweird.f32 %v1847
      %vm1854 = vmor %vm1852, %vm1853
      %v1855 = vsel %vm1854, %v1847, %v1851
      %v1856 = vand.u32 2147483647, %v1167
      %vm1857 = vcmp.eq.f32.partialorder %v1856, 8.507059e+37
      %v1858 = vand.u32 %v1167, 2147483648
      %v1859 = vor.u32 1.1754944e-38, %v1858
      %v1860 = vsel %vm1857, %v1859, %v1855
      %v1861 = vmul.f32 1.0, %v1860
      %v1862 = vrcp.pop %v1168
      %v1863 = vmul.f32 %v1168, %v1862
      %v1864 = vsub.f32 1.0, %v1863
      %v1865 = vmul.f32 %v1862, %v1864
      %v1866 = vadd.f32 %v1862, %v1865
      %vm1867 = vweird.f32 %v1168
      %vm1868 = vweird.f32 %v1862
      %vm1869 = vmor %vm1867, %vm1868
      %v1870 = vsel %vm1869, %v1862, %v1866
      %v1871 = vand.u32 2147483647, %v1168
      %vm1872 = vcmp.eq.f32.partialorder %v1871, 8.507059e+37
      %v1873 = vand.u32 %v1168, 2147483648
      %v1874 = vor.u32 1.1754944e-38, %v1873
      %v1875 = vsel %vm1872, %v1874, %v1870
      %v1876 = vmul.f32 1.0, %v1875
      %v1877 = vrcp.pop %v1169
      %v1878 = vmul.f32 %v1169, %v1877
      %v1879 = vsub.f32 1.0, %v1878
      %v1880 = vmul.f32 %v1877, %v1879
      %v1881 = vadd.f32 %v1877, %v1880
      %vm1882 = vweird.f32 %v1169
      %vm1883 = vweird.f32 %v1877
      %vm1884 = vmor %vm1882, %vm1883
      %v1885 = vsel %vm1884, %v1877, %v1881
      %v1886 = vand.u32 2147483647, %v1169
      %vm1887 = vcmp.eq.f32.partialorder %v1886, 8.507059e+37
      %v1888 = vand.u32 %v1169, 2147483648
      %v1889 = vor.u32 1.1754944e-38, %v1888
      %v1890 = vsel %vm1887, %v1889, %v1885
      %v1891 = vmul.f32 1.0, %v1890
      %v1892 = vrcp.pop %v1170
      %v1893 = vmul.f32 %v1170, %v1892
      %v1894 = vsub.f32 1.0, %v1893
      %v1895 = vmul.f32 %v1892, %v1894
      %v1896 = vadd.f32 %v1892, %v1895
      %vm1897 = vweird.f32 %v1170
      %vm1898 = vweird.f32 %v1892
      %vm1899 = vmor %vm1897, %vm1898
      %v1900 = vsel %vm1899, %v1892, %v1896
      %v1901 = vand.u32 2147483647, %v1170
      %vm1902 = vcmp.eq.f32.partialorder %v1901, 8.507059e+37
      %v1903 = vand.u32 %v1170, 2147483648
      %v1904 = vor.u32 1.1754944e-38, %v1903
      %v1905 = vsel %vm1902, %v1904, %v1900
      %v1906 = vmul.f32 1.0, %v1905
      %v1907 = vrcp.pop %v1171
      %v1908 = vmul.f32 %v1171, %v1907
      %v1909 = vsub.f32 1.0, %v1908
      %v1910 = vmul.f32 %v1907, %v1909
      %v1911 = vadd.f32 %v1907, %v1910
      %vm1912 = vweird.f32 %v1171
      %vm1913 = vweird.f32 %v1907
      %vm1914 = vmor %vm1912, %vm1913
      %v1915 = vsel %vm1914, %v1907, %v1911
      %v1916 = vand.u32 2147483647, %v1171
      %vm1917 = vcmp.eq.f32.partialorder %v1916, 8.507059e+37
      %v1918 = vand.u32 %v1171, 2147483648
      %v1919 = vor.u32 1.1754944e-38, %v1918
      %v1920 = vsel %vm1917, %v1919, %v1915
      %v1921 = vmul.f32 1.0, %v1920
      %v1922 = vrcp.pop %v1172
      %v1923 = vmul.f32 %v1172, %v1922
      %v1924 = vsub.f32 1.0, %v1923
      %v1925 = vmul.f32 %v1922, %v1924
      %v1926 = vadd.f32 %v1922, %v1925
      %vm1927 = vweird.f32 %v1172
      %vm1928 = vweird.f32 %v1922
      %vm1929 = vmor %vm1927, %vm1928
      %v1930 = vsel %vm1929, %v1922, %v1926
      %v1931 = vand.u32 2147483647, %v1172
      %vm1932 = vcmp.eq.f32.partialorder %v1931, 8.507059e+37
      %v1933 = vand.u32 %v1172, 2147483648
      %v1934 = vor.u32 1.1754944e-38, %v1933
      %v1935 = vsel %vm1932, %v1934, %v1930
      %v1936 = vmul.f32 1.0, %v1935
      %v1937 = vrcp.pop %v1173
      %v1938 = vmul.f32 %v1173, %v1937
      %v1939 = vsub.f32 1.0, %v1938
      %v1940 = vmul.f32 %v1937, %v1939
      %v1941 = vadd.f32 %v1937, %v1940
      %vm1942 = vweird.f32 %v1173
      %vm1943 = vweird.f32 %v1937
      %vm1944 = vmor %vm1942, %vm1943
      %v1945 = vsel %vm1944, %v1937, %v1941
      %v1946 = vand.u32 2147483647, %v1173
      %vm1947 = vcmp.eq.f32.partialorder %v1946, 8.507059e+37
      %v1948 = vand.u32 %v1173, 2147483648
      %v1949 = vor.u32 1.1754944e-38, %v1948
      %v1950 = vsel %vm1947, %v1949, %v1945
      %v1951 = vmul.f32 1.0, %v1950
      %v1952 = vrcp.pop %v1174
      %v1953 = vmul.f32 %v1174, %v1952
      %v1954 = vsub.f32 1.0, %v1953
      %v1955 = vmul.f32 %v1952, %v1954
      %v1956 = vadd.f32 %v1952, %v1955
      %vm1957 = vweird.f32 %v1174
      %vm1958 = vweird.f32 %v1952
      %vm1959 = vmor %vm1957, %vm1958
      %v1960 = vsel %vm1959, %v1952, %v1956
      %v1961 = vand.u32 2147483647, %v1174
      %vm1962 = vcmp.eq.f32.partialorder %v1961, 8.507059e+37
      %v1963 = vand.u32 %v1174, 2147483648
      %v1964 = vor.u32 1.1754944e-38, %v1963
      %v1965 = vsel %vm1962, %v1964, %v1960
      %v1966 = vmul.f32 1.0, %v1965
      %v1967 = vrcp.pop %v1175
      %v1968 = vmul.f32 %v1175, %v1967
      %v1969 = vsub.f32 1.0, %v1968
      %v1970 = vmul.f32 %v1967, %v1969
      %v1971 = vadd.f32 %v1967, %v1970
      %vm1972 = vweird.f32 %v1175
      %vm1973 = vweird.f32 %v1967
      %vm1974 = vmor %vm1972, %vm1973
      %v1975 = vsel %vm1974, %v1967, %v1971
      %v1976 = vand.u32 2147483647, %v1175
      %vm1977 = vcmp.eq.f32.partialorder %v1976, 8.507059e+37
      %v1978 = vand.u32 %v1175, 2147483648
      %v1979 = vor.u32 1.1754944e-38, %v1978
      %v1980 = vsel %vm1977, %v1979, %v1975
      %v1981 = vmul.f32 1.0, %v1980
      %v1982 = vrcp.pop %v1176
      %v1983 = vmul.f32 %v1176, %v1982
      %v1984 = vsub.f32 1.0, %v1983
      %v1985 = vmul.f32 %v1982, %v1984
      %v1986 = vadd.f32 %v1982, %v1985
      %vm1987 = vweird.f32 %v1176
      %vm1988 = vweird.f32 %v1982
      %vm1989 = vmor %vm1987, %vm1988
      %v1990 = vsel %vm1989, %v1982, %v1986
      %v1991 = vand.u32 2147483647, %v1176
      %vm1992 = vcmp.eq.f32.partialorder %v1991, 8.507059e+37
      %v1993 = vand.u32 %v1176, 2147483648
      %v1994 = vor.u32 1.1754944e-38, %v1993
      %v1995 = vsel %vm1992, %v1994, %v1990
      %v1996 = vmul.f32 1.0, %v1995
      %v1997 = vrcp.pop %v1177
      %v1998 = vmul.f32 %v1177, %v1997
      %v1999 = vsub.f32 1.0, %v1998
      %v2000 = vmul.f32 %v1997, %v1999
      %v2001 = vadd.f32 %v1997, %v2000
      %vm2002 = vweird.f32 %v1177
      %vm2003 = vweird.f32 %v1997
      %vm2004 = vmor %vm2002, %vm2003
      %v2005 = vsel %vm2004, %v1997, %v2001
      %v2006 = vand.u32 2147483647, %v1177
      %vm2007 = vcmp.eq.f32.partialorder %v2006, 8.507059e+37
      %v2008 = vand.u32 %v1177, 2147483648
      %v2009 = vor.u32 1.1754944e-38, %v2008
      %v2010 = vsel %vm2007, %v2009, %v2005
      %v2011 = vmul.f32 1.0, %v2010
      %v2012 = vrcp.pop %v1178
      %v2013 = vmul.f32 %v1178, %v2012
      %v2014 = vsub.f32 1.0, %v2013
      %v2015 = vmul.f32 %v2012, %v2014
      %v2016 = vadd.f32 %v2012, %v2015
      %vm2017 = vweird.f32 %v1178
      %vm2018 = vweird.f32 %v2012
      %vm2019 = vmor %vm2017, %vm2018
      %v2020 = vsel %vm2019, %v2012, %v2016
      %v2021 = vand.u32 2147483647, %v1178
      %vm2022 = vcmp.eq.f32.partialorder %v2021, 8.507059e+37
      %v2023 = vand.u32 %v1178, 2147483648
      %v2024 = vor.u32 1.1754944e-38, %v2023
      %v2025 = vsel %vm2022, %v2024, %v2020
      %v2026 = vmul.f32 1.0, %v2025
      %v2027 = vrcp.pop %v1179
      %v2028 = vmul.f32 %v1179, %v2027
      %v2029 = vsub.f32 1.0, %v2028
      %v2030 = vmul.f32 %v2027, %v2029
      %v2031 = vadd.f32 %v2027, %v2030
      %vm2032 = vweird.f32 %v1179
      %vm2033 = vweird.f32 %v2027
      %vm2034 = vmor %vm2032, %vm2033
      %v2035 = vsel %vm2034, %v2027, %v2031
      %v2036 = vand.u32 2147483647, %v1179
      %vm2037 = vcmp.eq.f32.partialorder %v2036, 8.507059e+37
      %v2038 = vand.u32 %v1179, 2147483648
      %v2039 = vor.u32 1.1754944e-38, %v2038
      %v2040 = vsel %vm2037, %v2039, %v2035
      %v2041 = vmul.f32 1.0, %v2040
      %v2042 = vrcp.pop %v1180
      %v2043 = vmul.f32 %v1180, %v2042
      %v2044 = vsub.f32 1.0, %v2043
      %v2045 = vmul.f32 %v2042, %v2044
      %v2046 = vadd.f32 %v2042, %v2045
      %vm2047 = vweird.f32 %v1180
      %vm2048 = vweird.f32 %v2042
      %vm2049 = vmor %vm2047, %vm2048
      %v2050 = vsel %vm2049, %v2042, %v2046
      %v2051 = vand.u32 2147483647, %v1180
      %vm2052 = vcmp.eq.f32.partialorder %v2051, 8.507059e+37
      %v2053 = vand.u32 %v1180, 2147483648
      %v2054 = vor.u32 1.1754944e-38, %v2053
      %v2055 = vsel %vm2052, %v2054, %v2050
      %v2056 = vmul.f32 1.0, %v2055
      %v2057 = vrcp.pop %v1181
      %v2058 = vmul.f32 %v1181, %v2057
      %v2059 = vsub.f32 1.0, %v2058
      %v2060 = vmul.f32 %v2057, %v2059
      %v2061 = vadd.f32 %v2057, %v2060
      %vm2062 = vweird.f32 %v1181
      %vm2063 = vweird.f32 %v2057
      %vm2064 = vmor %vm2062, %vm2063
      %v2065 = vsel %vm2064, %v2057, %v2061
      %v2066 = vand.u32 2147483647, %v1181
      %vm2067 = vcmp.eq.f32.partialorder %v2066, 8.507059e+37
      %v2068 = vand.u32 %v1181, 2147483648
      %v2069 = vor.u32 1.1754944e-38, %v2068
      %v2070 = vsel %vm2067, %v2069, %v2065
      %v2071 = vmul.f32 1.0, %v2070
      %v2072 = vrcp.pop %v1182
      %v2073 = vmul.f32 %v1182, %v2072
      %v2074 = vsub.f32 1.0, %v2073
      %v2075 = vmul.f32 %v2072, %v2074
      %v2076 = vadd.f32 %v2072, %v2075
      %vm2077 = vweird.f32 %v1182
      %vm2078 = vweird.f32 %v2072
      %vm2079 = vmor %vm2077, %vm2078
      %v2080 = vsel %vm2079, %v2072, %v2076
      %v2081 = vand.u32 2147483647, %v1182
      %vm2082 = vcmp.eq.f32.partialorder %v2081, 8.507059e+37
      %v2083 = vand.u32 %v1182, 2147483648
      %v2084 = vor.u32 1.1754944e-38, %v2083
      %v2085 = vsel %vm2082, %v2084, %v2080
      %v2086 = vmul.f32 1.0, %v2085
      %v2087 = vrcp.pop %v1183
      %v2088 = vmul.f32 %v1183, %v2087
      %v2089 = vsub.f32 1.0, %v2088
      %v2090 = vmul.f32 %v2087, %v2089
      %v2091 = vadd.f32 %v2087, %v2090
      %vm2092 = vweird.f32 %v1183
      %vm2093 = vweird.f32 %v2087
      %vm2094 = vmor %vm2092, %vm2093
      %v2095 = vsel %vm2094, %v2087, %v2091
      %v2096 = vand.u32 2147483647, %v1183
      %vm2097 = vcmp.eq.f32.partialorder %v2096, 8.507059e+37
      %v2098 = vand.u32 %v1183, 2147483648
      %v2099 = vor.u32 1.1754944e-38, %v2098
      %v2100 = vsel %vm2097, %v2099, %v2095
      %v2101 = vmul.f32 1.0, %v2100
      %v2102 = vrcp.pop %v1184
      %v2103 = vmul.f32 %v1184, %v2102
      %v2104 = vsub.f32 1.0, %v2103
      %v2105 = vmul.f32 %v2102, %v2104
      %v2106 = vadd.f32 %v2102, %v2105
      %vm2107 = vweird.f32 %v1184
      %vm2108 = vweird.f32 %v2102
      %vm2109 = vmor %vm2107, %vm2108
      %v2110 = vsel %vm2109, %v2102, %v2106
      %v2111 = vand.u32 2147483647, %v1184
      %vm2112 = vcmp.eq.f32.partialorder %v2111, 8.507059e+37
      %v2113 = vand.u32 %v1184, 2147483648
      %v2114 = vor.u32 1.1754944e-38, %v2113
      %v2115 = vsel %vm2112, %v2114, %v2110
      %v2116 = vmul.f32 1.0, %v2115
      %v2117 = vrcp.pop %v1185
      %v2118 = vmul.f32 %v1185, %v2117
      %v2119 = vsub.f32 1.0, %v2118
      %v2120 = vmul.f32 %v2117, %v2119
      %v2121 = vadd.f32 %v2117, %v2120
      %vm2122 = vweird.f32 %v1185
      %vm2123 = vweird.f32 %v2117
      %vm2124 = vmor %vm2122, %vm2123
      %v2125 = vsel %vm2124, %v2117, %v2121
      %v2126 = vand.u32 2147483647, %v1185
      %vm2127 = vcmp.eq.f32.partialorder %v2126, 8.507059e+37
      %v2128 = vand.u32 %v1185, 2147483648
      %v2129 = vor.u32 1.1754944e-38, %v2128
      %v2130 = vsel %vm2127, %v2129, %v2125
      %v2131 = vmul.f32 1.0, %v2130
      %v2132 = vrcp.pop %v1186
      %v2133 = vmul.f32 %v1186, %v2132
      %v2134 = vsub.f32 1.0, %v2133
      %v2135 = vmul.f32 %v2132, %v2134
      %v2136 = vadd.f32 %v2132, %v2135
      %vm2137 = vweird.f32 %v1186
      %vm2138 = vweird.f32 %v2132
      %vm2139 = vmor %vm2137, %vm2138
      %v2140 = vsel %vm2139, %v2132, %v2136
      %v2141 = vand.u32 2147483647, %v1186
      %vm2142 = vcmp.eq.f32.partialorder %v2141, 8.507059e+37
      %v2143 = vand.u32 %v1186, 2147483648
      %v2144 = vor.u32 1.1754944e-38, %v2143
      %v2145 = vsel %vm2142, %v2144, %v2140
      %v2146 = vmul.f32 1.0, %v2145
      %v2147 = vmul.f32 %v867, %v1201
      %v2148 = vmul.f32 %v868, %v1216
      %v2149 = vmul.f32 %v869, %v1231
      %v2150 = vmul.f32 %v870, %v1246
      %v2151 = vmul.f32 %v871, %v1261
      %v2152 = vmul.f32 %v872, %v1276
      %v2153 = vmul.f32 %v873, %v1291
      %v2154 = vmul.f32 %v874, %v1306
      %v2155 = vmul.f32 %v875, %v1321
      %v2156 = vmul.f32 %v876, %v1336
      %v2157 = vmul.f32 %v877, %v1351
      %v2158 = vmul.f32 %v878, %v1366
      %v2159 = vmul.f32 %v879, %v1381
      %v2160 = vmul.f32 %v880, %v1396
      %v2161 = vmul.f32 %v881, %v1411
      %v2162 = vmul.f32 %v882, %v1426
      %v2163 = vmul.f32 %v883, %v1441
      %v2164 = vmul.f32 %v884, %v1456
      %v2165 = vmul.f32 %v885, %v1471
      %v2166 = vmul.f32 %v886, %v1486
      %v2167 = vmul.f32 %v887, %v1501
      %v2168 = vmul.f32 %v888, %v1516
      %v2169 = vmul.f32 %v889, %v1531
      %v2170 = vmul.f32 %v890, %v1546
      %v2171 = vmul.f32 %v891, %v1561
      %v2172 = vmul.f32 %v892, %v1576
      %v2173 = vmul.f32 %v893, %v1591
      %v2174 = vmul.f32 %v894, %v1606
      %v2175 = vmul.f32 %v895, %v1621
      %v2176 = vmul.f32 %v896, %v1636
      %v2177 = vmul.f32 %v897, %v1651
      %v2178 = vmul.f32 %v898, %v1666
      %v2179 = vmul.f32 %v899, %v1681
      %v2180 = vmul.f32 %v900, %v1696
      %v2181 = vmul.f32 %v901, %v1711
      %v2182 = vmul.f32 %v902, %v1726
      %v2183 = vmul.f32 %v903, %v1741
      %v2184 = vmul.f32 %v904, %v1756
      %v2185 = vmul.f32 %v905, %v1771
      %v2186 = vmul.f32 %v906, %v1786
      %v2187 = vmul.f32 %v907, %v1801
      %v2188 = vmul.f32 %v908, %v1816
      %v2189 = vmul.f32 %v909, %v1831
      %v2190 = vmul.f32 %v910, %v1846
      %v2191 = vmul.f32 %v911, %v1861
      %v2192 = vmul.f32 %v912, %v1876
      %v2193 = vmul.f32 %v913, %v1891
      %v2194 = vmul.f32 %v914, %v1906
      %v2195 = vmul.f32 %v915, %v1921
      %v2196 = vmul.f32 %v916, %v1936
      %v2197 = vmul.f32 %v917, %v1951
      %v2198 = vmul.f32 %v918, %v1966
      %v2199 = vmul.f32 %v919, %v1981
      %v2200 = vmul.f32 %v920, %v1996
      %v2201 = vmul.f32 %v921, %v2011
      %v2202 = vmul.f32 %v922, %v2026
      %v2203 = vmul.f32 %v923, %v2041
      %v2204 = vmul.f32 %v924, %v2056
      %v2205 = vmul.f32 %v925, %v2071
      %v2206 = vmul.f32 %v926, %v2086
      %v2207 = vmul.f32 %v927, %v2101
      %v2208 = vmul.f32 %v928, %v2116
      %v2209 = vmul.f32 %v929, %v2131
      %v2210 = vmul.f32 %v930, %v2146
      %v2211 = vpack.c.bf16 %v2147, %v2147
      %v2212 = vpack.c.bf16 %v2148, %v2148
      %v2213 = vpack.c.bf16 %v2149, %v2149
      %v2214 = vpack.c.bf16 %v2150, %v2150
      %v2215 = vpack.c.bf16 %v2151, %v2151
      %v2216 = vpack.c.bf16 %v2152, %v2152
      %v2217 = vpack.c.bf16 %v2153, %v2153
      %v2218 = vpack.c.bf16 %v2154, %v2154
      %v2219 = vpack.c.bf16 %v2155, %v2155
      %v2220 = vpack.c.bf16 %v2156, %v2156
      %v2221 = vpack.c.bf16 %v2157, %v2157
      %v2222 = vpack.c.bf16 %v2158, %v2158
      %v2223 = vpack.c.bf16 %v2159, %v2159
      %v2224 = vpack.c.bf16 %v2160, %v2160
      %v2225 = vpack.c.bf16 %v2161, %v2161
      %v2226 = vpack.c.bf16 %v2162, %v2162
      %v2227 = vpack.c.bf16 %v2163, %v2163
      %v2228 = vpack.c.bf16 %v2164, %v2164
      %v2229 = vpack.c.bf16 %v2165, %v2165
      %v2230 = vpack.c.bf16 %v2166, %v2166
      %v2231 = vpack.c.bf16 %v2167, %v2167
      %v2232 = vpack.c.bf16 %v2168, %v2168
      %v2233 = vpack.c.bf16 %v2169, %v2169
      %v2234 = vpack.c.bf16 %v2170, %v2170
      %v2235 = vpack.c.bf16 %v2171, %v2171
      %v2236 = vpack.c.bf16 %v2172, %v2172
      %v2237 = vpack.c.bf16 %v2173, %v2173
      %v2238 = vpack.c.bf16 %v2174, %v2174
      %v2239 = vpack.c.bf16 %v2175, %v2175
      %v2240 = vpack.c.bf16 %v2176, %v2176
      %v2241 = vpack.c.bf16 %v2177, %v2177
      %v2242 = vpack.c.bf16 %v2178, %v2178
      %v2243 = vpack.c.bf16 %v2179, %v2179
      %v2244 = vpack.c.bf16 %v2180, %v2180
      %v2245 = vpack.c.bf16 %v2181, %v2181
      %v2246 = vpack.c.bf16 %v2182, %v2182
      %v2247 = vpack.c.bf16 %v2183, %v2183
      %v2248 = vpack.c.bf16 %v2184, %v2184
      %v2249 = vpack.c.bf16 %v2185, %v2185
      %v2250 = vpack.c.bf16 %v2186, %v2186
      %v2251 = vpack.c.bf16 %v2187, %v2187
      %v2252 = vpack.c.bf16 %v2188, %v2188
      %v2253 = vpack.c.bf16 %v2189, %v2189
      %v2254 = vpack.c.bf16 %v2190, %v2190
      %v2255 = vpack.c.bf16 %v2191, %v2191
      %v2256 = vpack.c.bf16 %v2192, %v2192
      %v2257 = vpack.c.bf16 %v2193, %v2193
      %v2258 = vpack.c.bf16 %v2194, %v2194
      %v2259 = vpack.c.bf16 %v2195, %v2195
      %v2260 = vpack.c.bf16 %v2196, %v2196
      %v2261 = vpack.c.bf16 %v2197, %v2197
      %v2262 = vpack.c.bf16 %v2198, %v2198
      %v2263 = vpack.c.bf16 %v2199, %v2199
      %v2264 = vpack.c.bf16 %v2200, %v2200
      %v2265 = vpack.c.bf16 %v2201, %v2201
      %v2266 = vpack.c.bf16 %v2202, %v2202
      %v2267 = vpack.c.bf16 %v2203, %v2203
      %v2268 = vpack.c.bf16 %v2204, %v2204
      %v2269 = vpack.c.bf16 %v2205, %v2205
      %v2270 = vpack.c.bf16 %v2206, %v2206
      %v2271 = vpack.c.bf16 %v2207, %v2207
      %v2272 = vpack.c.bf16 %v2208, %v2208
      %v2273 = vpack.c.bf16 %v2209, %v2209
      %v2274 = vpack.c.bf16 %v2210, %v2210
      %2275 = vst [vmem:[#allocation8] sm:$0xf] %v2211
      %2276 = vst [vmem:[#allocation8 + $0x4] sm:$0xf] %v2212
      %2277 = vst [vmem:[#allocation8 + $0x8] sm:$0xf] %v2213
      %2278 = vst [vmem:[#allocation8 + $0xc] sm:$0xf] %v2214
      %2279 = vst [vmem:[#allocation8 + $0x10] sm:$0xf] %v2215
      %2280 = vst [vmem:[#allocation8 + $0x14] sm:$0xf] %v2216
      %2281 = vst [vmem:[#allocation8 + $0x18] sm:$0xf] %v2217
      %2282 = vst [vmem:[#allocation8 + $0x1c] sm:$0xf] %v2218
      %2283 = vst [vmem:[#allocation8 + $0x20] sm:$0xf] %v2219
      %2284 = vst [vmem:[#allocation8 + $0x24] sm:$0xf] %v2220
      %2285 = vst [vmem:[#allocation8 + $0x28] sm:$0xf] %v2221
      %2286 = vst [vmem:[#allocation8 + $0x2c] sm:$0xf] %v2222
      %2287 = vst [vmem:[#allocation8 + $0x30] sm:$0xf] %v2223
      %2288 = vst [vmem:[#allocation8 + $0x34] sm:$0xf] %v2224
      %2289 = vst [vmem:[#allocation8 + $0x38] sm:$0xf] %v2225
      %2290 = vst [vmem:[#allocation8 + $0x3c] sm:$0xf] %v2226
      %2291 = vst [vmem:[#allocation8 + $0x40] sm:$0xf] %v2227
      %2292 = vst [vmem:[#allocation8 + $0x44] sm:$0xf] %v2228
      %2293 = vst [vmem:[#allocation8 + $0x48] sm:$0xf] %v2229
      %2294 = vst [vmem:[#allocation8 + $0x4c] sm:$0xf] %v2230
      %2295 = vst [vmem:[#allocation8 + $0x50] sm:$0xf] %v2231
      %2296 = vst [vmem:[#allocation8 + $0x54] sm:$0xf] %v2232
      %2297 = vst [vmem:[#allocation8 + $0x58] sm:$0xf] %v2233
      %2298 = vst [vmem:[#allocation8 + $0x5c] sm:$0xf] %v2234
      %2299 = vst [vmem:[#allocation8 + $0x60] sm:$0xf] %v2235
      %2300 = vst [vmem:[#allocation8 + $0x64] sm:$0xf] %v2236
      %2301 = vst [vmem:[#allocation8 + $0x68] sm:$0xf] %v2237
      %2302 = vst [vmem:[#allocation8 + $0x6c] sm:$0xf] %v2238
      %2303 = vst [vmem:[#allocation8 + $0x70] sm:$0xf] %v2239
      %2304 = vst [vmem:[#allocation8 + $0x74] sm:$0xf] %v2240
      %2305 = vst [vmem:[#allocation8 + $0x78] sm:$0xf] %v2241
      %2306 = vst [vmem:[#allocation8 + $0x7c] sm:$0xf] %v2242
      %2307 = vst [vmem:[#allocation8 + $0x80] sm:$0xf] %v2243
      %2308 = vst [vmem:[#allocation8 + $0x84] sm:$0xf] %v2244
      %2309 = vst [vmem:[#allocation8 + $0x88] sm:$0xf] %v2245
      %2310 = vst [vmem:[#allocation8 + $0x8c] sm:$0xf] %v2246
      %2311 = vst [vmem:[#allocation8 + $0x90] sm:$0xf] %v2247
      %2312 = vst [vmem:[#allocation8 + $0x94] sm:$0xf] %v2248
      %2313 = vst [vmem:[#allocation8 + $0x98] sm:$0xf] %v2249
      %2314 = vst [vmem:[#allocation8 + $0x9c] sm:$0xf] %v2250
      %2315 = vst [vmem:[#allocation8 + $0xa0] sm:$0xf] %v2251
      %2316 = vst [vmem:[#allocation8 + $0xa4] sm:$0xf] %v2252
      %2317 = vst [vmem:[#allocation8 + $0xa8] sm:$0xf] %v2253
      %2318 = vst [vmem:[#allocation8 + $0xac] sm:$0xf] %v2254
      %2319 = vst [vmem:[#allocation8 + $0xb0] sm:$0xf] %v2255
      %2320 = vst [vmem:[#allocation8 + $0xb4] sm:$0xf] %v2256
      %2321 = vst [vmem:[#allocation8 + $0xb8] sm:$0xf] %v2257
      %2322 = vst [vmem:[#allocation8 + $0xbc] sm:$0xf] %v2258
      %2323 = vst [vmem:[#allocation8 + $0xc0] sm:$0xf] %v2259
      %2324 = vst [vmem:[#allocation8 + $0xc4] sm:$0xf] %v2260
      %2325 = vst [vmem:[#allocation8 + $0xc8] sm:$0xf] %v2261
      %2326 = vst [vmem:[#allocation8 + $0xcc] sm:$0xf] %v2262
      %2327 = vst [vmem:[#allocation8 + $0xd0] sm:$0xf] %v2263
      %2328 = vst [vmem:[#allocation8 + $0xd4] sm:$0xf] %v2264
      %2329 = vst [vmem:[#allocation8 + $0xd8] sm:$0xf] %v2265
      %2330 = vst [vmem:[#allocation8 + $0xdc] sm:$0xf] %v2266
      %2331 = vst [vmem:[#allocation8 + $0xe0] sm:$0xf] %v2267
      %2332 = vst [vmem:[#allocation8 + $0xe4] sm:$0xf] %v2268
      %2333 = vst [vmem:[#allocation8 + $0xe8] sm:$0xf] %v2269
      %2334 = vst [vmem:[#allocation8 + $0xec] sm:$0xf] %v2270
      %2335 = vst [vmem:[#allocation8 + $0xf0] sm:$0xf] %v2271
      %2336 = vst [vmem:[#allocation8 + $0xf4] sm:$0xf] %v2272
      %2337 = vst [vmem:[#allocation8 + $0xf8] sm:$0xf] %v2273
      %2338 = vst [vmem:[#allocation8 + $0xfc] sm:$0xf] %v2274
    $region29: #{tpu_custom_call.1} parent=1 // pred_fallthru
      _
    // Predicated region
    $region30: #{tpu_custom_call.1} parent=1 // pred_check
      _
    $region31: #{tpu_custom_call.1} parent=1 // pred_check_branch
      %2340 = sbr.rel (0) target = $region33
    $region32: #{tpu_custom_call.1} parent=1 // pred_region
      %2342 = vsyncadd [#allocation5], 0
      %s2343 = sshll.u32 [#allocation8], 4
      %s2344 = int_to_ptr.vmem [resolvable:$true] %s2343
      %s2345 = sshll.u32 %s3, 4
      %s2346 = int_to_ptr.hbm [resolvable:$true] %s2345
      %2351 = dma.vmem_to_hbm [thread:$0]  %s2344, 4096, %s2346, [#allocation5], 64, 64, 4
    $region33: #{tpu_custom_call.1} parent=1 // pred_fallthru
      _
    // Predicated region
    $region34: #{tpu_custom_call.1} parent=1 // pred_check
      _
    $region35: #{tpu_custom_call.1} parent=1 // pred_check_branch
      %2353 = sbr.rel (0) target = $region37
    $region36: #{tpu_custom_call.1} parent=1 // pred_region
      %2355 = dma.done [#allocation5], 4096
    $region37: #{tpu_custom_call.1} parent=1 // pred_fallthru
      _
    %2356 = vsyncpa [#allocation4], 1
    %2357 = vsyncpa [#allocation7], 1
    %2358 = vsyncpa [#allocation5], 1

</llo_original>
